<compile_context>
chip_gen: v5e
topology: v5e:2x2
jax: 0.10.0
libtpu: 0.0.40
codegen_flags: <defaults>
</compile_context>

<pallas_src>
import math
import functools

import jax
import jax.numpy as jnp
from jax.experimental import pallas as pl
from jax.experimental.pallas import tpu as pltpu

# Scoped VMEM budget: safe on v5e/v6e (128 MiB) and v7x (64 MiB physical).
_VMEM_LIMIT = 32 * 1024 * 1024


def _pick_tile(dim, preferred, quantum):
    """Largest divisor of `dim` that is a multiple of `quantum` and <= `preferred`;
    falls back to the full dim (always legal w.r.t. the (8,128) block rule)."""
    if dim <= preferred:
        return dim
    t = (preferred // quantum) * quantum
    while t >= quantum:
        if dim % t == 0:
            return t
        t -= quantum
    return dim


# ----------------------------- Pallas kernels ------------------------------

def linear_pallas(x, w, b, activation=None, tm=256, tn=256, tk=512):
    """y = act(x @ w + b).  x: [M, K], w: [K, N], b: [N] -> [M, N].

    Tiled/pipelined MXU matmul: parallel M/N grid axes (megacore), arbitrary K reduction
    axis with a resident VMEM f32 accumulator."""
    M, K = x.shape
    N = w.shape[1]
    tm = _pick_tile(M, tm, 8)      # sublane-dim tile
    tn = _pick_tile(N, tn, 128)    # lane-dim tile (lane-dense stores)
    tk = _pick_tile(K, tk, 128)
    grid = (M // tm, N // tn, K // tk)

    def kernel(x_ref, w_ref, b_ref, o_ref, acc_ref):
        @pl.when(pl.program_id(2) == 0)
        def _init():
            acc_ref[...] = jnp.zeros_like(acc_ref)

        acc_ref[...] += jnp.dot(x_ref[...], w_ref[...],
                                preferred_element_type=jnp.float32)

        @pl.when(pl.program_id(2) == pl.num_programs(2) - 1)
        def _finalize():
            y = acc_ref[...] + b_ref[...].astype(jnp.float32)
            if activation == "gelu":
                # TODO(synk): PyTorch nn.GELU defaults to exact erf; tanh approx used
                # here (Mosaic-safe EUP path), small numeric difference vs. the reference.
                y = jax.nn.gelu(y)
            elif activation == "relu":
                y = jnp.maximum(y, 0.0)
            o_ref[...] = y.astype(o_ref.dtype)

    return pl.pallas_call(
        kernel,
        out_shape=jax.ShapeDtypeStruct((M, N), x.dtype),
        grid_spec=pltpu.PrefetchScalarGridSpec(
            num_scalar_prefetch=0,
            grid=grid,
            in_specs=[
                pl.BlockSpec((tm, tk), lambda i, j, k: (i, k)),
                pl.BlockSpec((tk, tn), lambda i, j, k: (k, j)),
                pl.BlockSpec((1, tn), lambda i, j, k: (0, j)),
            ],
            out_specs=pl.BlockSpec((tm, tn), lambda i, j, k: (i, j)),
            scratch_shapes=[pltpu.VMEM((tm, tn), jnp.float32)],
        ),
        compiler_params=pltpu.CompilerParams(
            dimension_semantics=("parallel", "parallel", "arbitrary"),
            vmem_limit_bytes=_VMEM_LIMIT,
        ),
    )(x, w, b.reshape(1, N))


def residual_layernorm_pallas(x, resid, gamma, beta, eps, tm=512):
    """LN(x + resid) over the last axis (biased variance, like torch.nn.LayerNorm).
    Residual add is fused into the kernel -> one HBM pass instead of two."""
    M, D = x.shape
    tm = _pick_tile(M, tm, 8)
    grid = (M // tm,)

    def kernel(x_ref, r_ref, g_ref, b_ref, o_ref):
        xf = x_ref[...].astype(jnp.float32) + r_ref[...].astype(jnp.float32)
        mean = jnp.mean(xf, axis=-1, keepdims=True)
        cen = xf - mean
        var = jnp.mean(cen * cen, axis=-1, keepdims=True)
        xn = cen * jax.lax.rsqrt(var + eps)
        o_ref[...] = (xn * g_ref[...] + b_ref[...]).astype(o_ref.dtype)

    row_spec = pl.BlockSpec((tm, D), lambda i: (i, 0))
    vec_spec = pl.BlockSpec((1, D), lambda i: (0, 0))
    return pl.pallas_call(
        kernel,
        out_shape=jax.ShapeDtypeStruct((M, D), x.dtype),
        grid_spec=pltpu.PrefetchScalarGridSpec(
            num_scalar_prefetch=0,
            grid=grid,
            in_specs=[row_spec, row_spec, vec_spec, vec_spec],
            out_specs=row_spec,
        ),
        compiler_params=pltpu.CompilerParams(
            dimension_semantics=("parallel",),
            vmem_limit_bytes=_VMEM_LIMIT,
        ),
    )(x, resid, gamma.reshape(1, D), beta.reshape(1, D))


def attention_pallas(qkv, wo, bo, heads, causal=True):
    """Multi-head causal self-attention + fused output projection.

    qkv: [B, S, 3*D] from the fused QKV projection (lanes ordered q | k | v), D = heads*Dh.
    wo:  [D, D], bo: [D].  Returns [B, S, D] = concat_heads(softmax(qk^T)v) @ wo + bo.

    One grid step per batch element handles ALL heads; head split is done with static lane
    slices of the fused QKV block in-kernel, per-head outputs are written into a VMEM scratch
    [S, D] slab, and a single [S,D]@[D,D] MXU matmul applies the output projection -> no
    intermediate [B,S,D] HBM round-trip and a lane-dense output store."""
    B, S, D3 = qkv.shape
    D = D3 // 3
    Dh = D // heads
    scale = 1.0 / math.sqrt(Dh)

    # TODO(synk): for long sequences convert to a flash-style tiled kernel
    # (grid (B, S//tq, S//tk), online-softmax scratch) instead of the full [S,S] scores.
    def kernel(qkv_ref, wo_ref, bo_ref, o_ref, cat_ref):
        if causal:
            # Computed once per grid step, reused by every head.
            row = jax.lax.broadcasted_iota(jnp.int32, (S, S), 0)
            col = jax.lax.broadcasted_iota(jnp.int32, (S, S), 1)
            keep = col <= row
        for h in range(heads):                         # static unroll: all heads, one launch
            q0 = h * Dh
            qh = qkv_ref[0, :, pl.ds(q0, Dh)] * scale  # scale folded into q (O(S*Dh))
            kh = qkv_ref[0, :, pl.ds(D + q0, Dh)]
            vh = qkv_ref[0, :, pl.ds(2 * D + q0, Dh)]
            # Native-dtype MXU operands; f32 accumulate via preferred_element_type.
            s = jnp.dot(qh, kh.T, preferred_element_type=jnp.float32)   # [S, S]
            if causal:
                s = jnp.where(keep, s, jnp.float32(-1e9))
            # softmax in f32 on the VPU/EUP
            m = jnp.max(s, axis=-1, keepdims=True)
            p = jnp.exp(s - m)
            l = jnp.sum(p, axis=-1, keepdims=True)
            p = p * pl.reciprocal(l, approx=True)
            cat_ref[:, pl.ds(q0, Dh)] = jnp.dot(
                p.astype(vh.dtype), vh, preferred_element_type=jnp.float32)
        # Fused output projection: one [S,D] @ [D,D] matmul + bias, lane-dense store.
        proj = jnp.dot(cat_ref[...].astype(wo_ref.dtype), wo_ref[...],
                       preferred_element_type=jnp.float32)
        o_ref[0] = (proj + bo_ref[...].astype(jnp.float32)).astype(o_ref.dtype)

    in_spec = pl.BlockSpec((1, S, D3), lambda b: (b, 0, 0))
    wo_spec = pl.BlockSpec((D, D), lambda b: (0, 0))
    bo_spec = pl.BlockSpec((1, D), lambda b: (0, 0))
    out_spec = pl.BlockSpec((1, S, D), lambda b: (b, 0, 0))
    return pl.pallas_call(
        kernel,
        out_shape=jax.ShapeDtypeStruct((B, S, D), qkv.dtype),
        grid_spec=pltpu.PrefetchScalarGridSpec(
            num_scalar_prefetch=0,
            grid=(B,),
            in_specs=[in_spec, wo_spec, bo_spec],
            out_specs=out_spec,
            scratch_shapes=[pltpu.VMEM((S, D), jnp.float32)],
        ),
        compiler_params=pltpu.CompilerParams(
            dimension_semantics=("parallel",),
            vmem_limit_bytes=_VMEM_LIMIT,
        ),
    )(qkv, wo, bo.reshape(1, D))


# ----------------------------- Model (glue) --------------------------------

def sinusoidal_pe(seq_len, d_model):
    pos = jnp.arange(seq_len, dtype=jnp.float32)[:, None]
    i = jnp.arange(d_model, dtype=jnp.float32)[None, :]
    angle = pos / jnp.power(10000.0, (2.0 * jnp.floor(i / 2.0)) / d_model)
    pe = jnp.where((jnp.arange(d_model) % 2) == 0, jnp.sin(angle), jnp.cos(angle))
    return pe.astype(jnp.float32)                       # [S, D]


def init_params(key, token_size, n, d_model, heads, d_ff):
    def normal(k, shape, scale=0.02):
        return (scale * jax.random.normal(k, shape)).astype(jnp.float32)

    keys = jax.random.split(key, 2 + n)
    params = {
        "tok_emb": normal(keys[0], (token_size, d_model)),
        "cls_w": normal(keys[1], (d_model, token_size)),
        "cls_b": jnp.zeros((token_size,), jnp.float32),
        "layers": [],
    }
    for li in range(n):
        lk = jax.random.split(keys[2 + li], 6)
        # wq|wk|wv fused into a single [D, 3D] weight -> one QKV projection launch.
        w_qkv = jnp.concatenate(
            [normal(lk[0], (d_model, d_model)),
             normal(lk[1], (d_model, d_model)),
             normal(lk[2], (d_model, d_model))], axis=1)
        layer = {
            "w_qkv": w_qkv, "b_qkv": jnp.zeros((3 * d_model,), jnp.float32),
            "wo": normal(lk[3], (d_model, d_model)), "bo": jnp.zeros((d_model,), jnp.float32),
            "ln1_g": jnp.ones((d_model,), jnp.float32), "ln1_b": jnp.zeros((d_model,), jnp.float32),
            "w1": normal(lk[4], (d_model, d_ff)), "b1": jnp.zeros((d_ff,), jnp.float32),
            "w2": normal(lk[5], (d_ff, d_model)), "b2": jnp.zeros((d_model,), jnp.float32),
            "ln2_g": jnp.ones((d_model,), jnp.float32), "ln2_b": jnp.zeros((d_model,), jnp.float32),
        }
        params["layers"].append(layer)
    return params


def decoder_layer(x2, p, B, S, heads, eps, activation):
    BS, D = x2.shape

    qkv = linear_pallas(x2, p["w_qkv"], p["b_qkv"])          # fused QKV: one launch, one read of x
    # attention + output projection fused in one kernel: [B, S, D]
    attn = attention_pallas(qkv.reshape(B, S, 3 * D), p["wo"], p["bo"], heads, causal=True)

    # dropout_rate = 0.0 -> identity; residual add fused into the LN kernel.
    x2 = residual_layernorm_pallas(x2, attn.reshape(BS, D), p["ln1_g"], p["ln1_b"], eps)

    ff = linear_pallas(x2, p["w1"], p["b1"], activation=activation)
    ff = linear_pallas(ff, p["w2"], p["b2"])
    x2 = residual_layernorm_pallas(x2, ff, p["ln2_g"], p["ln2_b"], eps)
    return x2


def gpt_forward(params, tokens, *, d_model, heads, eps, activation):
    """tokens: int32 [B, S] -> logits float32 [B, S, token_size]."""
    B, S = tokens.shape
    token_size = params["tok_emb"].shape[0]

    # TextAndPositonEmbeded: embedding lookup + sinusoidal PE.
    # TODO(synk): data-dependent embedding gather left to XLA (no rectangular BlockSpec).
    x = jnp.take(params["tok_emb"], tokens, axis=0) * jnp.sqrt(jnp.float32(d_model))
    x = x + sinusoidal_pe(S, d_model)[None, :, :]

    x2 = x.reshape(B * S, d_model)
    for layer in params["layers"]:
        x2 = decoder_layer(x2, layer, B, S, heads, eps, activation)

    # Classifier: vocab (N) axis is tiled automatically by linear_pallas.
    logits = linear_pallas(x2, params["cls_w"], params["cls_b"])
    return logits.reshape(B, S, token_size)


# --------------------------------- main -------------------------------------

if __name__ == "__main__":
    token_size = 64
    n_layers = 2
    d_model = 32
    heads = 4
    d_ff = 64
    dropout_rate = 0.0   # dropout is identity
    eps = 1e-5
    activation = "gelu"

    B, S = 2, 8

    key = jax.random.PRNGKey(0)
    pkey, tkey = jax.random.split(key)
    params = init_params(pkey, token_size, n_layers, d_model, heads, d_ff)
    tokens = jax.random.randint(tkey, (B, S), 0, token_size, dtype=jnp.int32)

    fwd = jax.jit(functools.partial(gpt_forward, d_model=d_model, heads=heads,
                                    eps=eps, activation=activation))
    logits = jax.block_until_ready(fwd(params, tokens))

    assert logits.shape == (B, S, token_size)
    assert bool(jnp.all(jnp.isfinite(logits)))
    print("KERNEL_OK")
</pallas_src>

<mosaic_0001>
module attributes {stable_mosaic.version = 11 : i64} {
  func.func @kernel(%arg0: i32, %arg1: i32, %arg2: i32, %arg3: memref<16x32xf32, #tpu.memory_space<vmem>>, %arg4: memref<32x96xf32, #tpu.memory_space<vmem>>, %arg5: memref<1x96xf32, #tpu.memory_space<vmem>>, %arg6: memref<16x96xf32, #tpu.memory_space<vmem>>, %arg7: memref<16x96xf32, #tpu.memory_space<vmem>>) attributes {dimension_semantics = [#tpu.dimension_semantics<parallel>, #tpu.dimension_semantics<parallel>, #tpu.dimension_semantics<arbitrary>], iteration_bounds = array<i64: 1, 1, 1>, scalar_prefetch = 0 : i64, scratch_operands = 1 : i64, tpu.core_type = #tpu.core_type<tc>, window_params = [{transform_indices = @transform_0, window_bounds = array<i64: 16, 32>}, {transform_indices = @transform_1, window_bounds = array<i64: 32, 96>}, {transform_indices = @transform_2, window_bounds = array<i64: 1, 96>}, {transform_indices = @transform_3, window_bounds = array<i64: 16, 96>}]} {
    %c0_i32 = arith.constant 0 : i32
    %0 = arith.cmpi eq, %arg2, %c0_i32 : i32
    %1 = arith.extui %0 : i1 to i32
    %c0_i32_0 = arith.constant 0 : i32
    %2 = arith.cmpi ne, %1, %c0_i32_0 : i32
    scf.if %2 {
      %cst_10 = arith.constant 0.000000e+00 : f32
      %12 = vector.broadcast %cst_10 : f32 to vector<16x96xf32>
      %c0_11 = arith.constant 0 : index
      %c0_12 = arith.constant 0 : index
      %13 = vector.load %arg7[%c0_11, %c0_12] : memref<16x96xf32, #tpu.memory_space<vmem>>, vector<16x96xf32>
      tpu.vector_store %arg7[%c0_11, %c0_12], %12 {strides = array<i32>} : memref<16x96xf32, #tpu.memory_space<vmem>>, vector<16x96xf32>,
    } else {
    }
    %c0 = arith.constant 0 : index
    %c0_1 = arith.constant 0 : index
    %3 = vector.load %arg7[%c0, %c0_1] : memref<16x96xf32, #tpu.memory_space<vmem>>, vector<16x96xf32>
    %c0_2 = arith.constant 0 : index
    %c0_3 = arith.constant 0 : index
    %4 = vector.load %arg3[%c0_2, %c0_3] : memref<16x32xf32, #tpu.memory_space<vmem>>, vector<16x32xf32>
    %c0_4 = arith.constant 0 : index
    %c0_5 = arith.constant 0 : index
    %5 = vector.load %arg4[%c0_4, %c0_5] : memref<32x96xf32, #tpu.memory_space<vmem>>, vector<32x96xf32>
    %cst = arith.constant dense<0.000000e+00> : vector<16x96xf32>
    %6 = tpu.matmul %4, %5, %cst {dimension_numbers = #tpu.dot_dimension_numbers<[1], [0], [0], [1], [0, 0, 1, 1], [], []>} : vector<16x32xf32>, vector<32x96xf32>, vector<16x96xf32> -> vector<16x96xf32>
    %7 = arith.addf %3, %6 : vector<16x96xf32>
    %c0_6 = arith.constant 0 : index
    %c0_7 = arith.constant 0 : index
    %8 = vector.load %arg7[%c0_6, %c0_7] : memref<16x96xf32, #tpu.memory_space<vmem>>, vector<16x96xf32>
    tpu.vector_store %arg7[%c0_6, %c0_7], %7 {strides = array<i32>} : memref<16x96xf32, #tpu.memory_space<vmem>>, vector<16x96xf32>,
    %c0_i32_8 = arith.constant 0 : i32
    %9 = arith.cmpi eq, %arg2, %c0_i32_8 : i32
    %10 = arith.extui %9 : i1 to i32
    %c0_i32_9 = arith.constant 0 : i32
    %11 = arith.cmpi ne, %10, %c0_i32_9 : i32
    scf.if %11 {
      %c0_10 = arith.constant 0 : index
      %c0_11 = arith.constant 0 : index
      %12 = vector.load %arg7[%c0_10, %c0_11] : memref<16x96xf32, #tpu.memory_space<vmem>>, vector<16x96xf32>
      %c0_12 = arith.constant 0 : index
      %c0_13 = arith.constant 0 : index
      %13 = vector.load %arg5[%c0_12, %c0_13] : memref<1x96xf32, #tpu.memory_space<vmem>>, vector<1x96xf32>
      %14 = vector.broadcast %13 : vector<1x96xf32> to vector<16x96xf32>
      %15 = arith.addf %12, %14 : vector<16x96xf32>
      %c0_14 = arith.constant 0 : index
      %c0_15 = arith.constant 0 : index
      %16 = vector.load %arg6[%c0_14, %c0_15] : memref<16x96xf32, #tpu.memory_space<vmem>>, vector<16x96xf32>
      tpu.vector_store %arg6[%c0_14, %c0_15], %15 {strides = array<i32>} : memref<16x96xf32, #tpu.memory_space<vmem>>, vector<16x96xf32>,
    } else {
    }
    return
  }
  func.func @transform_0(%arg0: i32, %arg1: i32, %arg2: i32) -> (i32, i32) {
    %c0_i32 = arith.constant 0 : i32
    return %arg0, %arg2 : i32, i32
  }
  func.func @transform_1(%arg0: i32, %arg1: i32, %arg2: i32) -> (i32, i32) {
    %c0_i32 = arith.constant 0 : i32
    return %arg2, %arg1 : i32, i32
  }
  func.func @transform_2(%arg0: i32, %arg1: i32, %arg2: i32) -> (i32, i32) {
    %c0_i32 = arith.constant 0 : i32
    %c0_i32_0 = arith.constant 0 : i32
    return %c0_i32, %arg1 : i32, i32
  }
  func.func @transform_3(%arg0: i32, %arg1: i32, %arg2: i32) -> (i32, i32) {
    %c0_i32 = arith.constant 0 : i32
    return %arg0, %arg1 : i32, i32
  }
}

module attributes {stable_mosaic.version = 11 : i64} {
  func.func @kernel(%arg0: i32, %arg1: memref<16x32xf32, #tpu.memory_space<vmem>>, %arg2: memref<16x32xf32, #tpu.memory_space<vmem>>, %arg3: memref<1x32xf32, #tpu.memory_space<vmem>>, %arg4: memref<1x32xf32, #tpu.memory_space<vmem>>, %arg5: memref<16x32xf32, #tpu.memory_space<vmem>>) attributes {dimension_semantics = [#tpu.dimension_semantics<parallel>], iteration_bounds = array<i64: 1>, scalar_prefetch = 0 : i64, scratch_operands = 0 : i64, tpu.core_type = #tpu.core_type<tc>, window_params = [{transform_indices = @transform_0, window_bounds = array<i64: 16, 32>}, {transform_indices = @transform_1, window_bounds = array<i64: 16, 32>}, {pipeline_mode = #tpu.pipeline_mode<synchronous>, transform_indices = @transform_2, window_bounds = array<i64: 1, 32>}, {pipeline_mode = #tpu.pipeline_mode<synchronous>, transform_indices = @transform_3, window_bounds = array<i64: 1, 32>}, {transform_indices = @transform_4, window_bounds = array<i64: 16, 32>}]} {
    %c0 = arith.constant 0 : index
    %c0_0 = arith.constant 0 : index
    %0 = vector.load %arg1[%c0, %c0_0] : memref<16x32xf32, #tpu.memory_space<vmem>>, vector<16x32xf32>
    %c0_1 = arith.constant 0 : index
    %c0_2 = arith.constant 0 : index
    %1 = vector.load %arg2[%c0_1, %c0_2] : memref<16x32xf32, #tpu.memory_space<vmem>>, vector<16x32xf32>
    %2 = arith.addf %0, %1 : vector<16x32xf32>
    %cst = arith.constant dense<0.000000e+00> : vector<16xf32>
    %3 = vector.multi_reduction <add>, %2, %cst [1] : vector<16x32xf32> to vector<16xf32>
    %4 = vector.shape_cast %3 : vector<16xf32> to vector<16x1xf32>
    %cst_3 = arith.constant 3.200000e+01 : f32
    %5 = vector.broadcast %cst_3 : f32 to vector<16x1xf32>
    %6 = arith.divf %4, %5 : vector<16x1xf32>
    %7 = vector.broadcast %6 : vector<16x1xf32> to vector<16x32xf32>
    %8 = arith.subf %2, %7 : vector<16x32xf32>
    %9 = arith.mulf %8, %8 : vector<16x32xf32>
    %cst_4 = arith.constant dense<0.000000e+00> : vector<16xf32>
    %10 = vector.multi_reduction <add>, %9, %cst_4 [1] : vector<16x32xf32> to vector<16xf32>
    %11 = vector.shape_cast %10 : vector<16xf32> to vector<16x1xf32>
    %cst_5 = arith.constant 3.200000e+01 : f32
    %12 = vector.broadcast %cst_5 : f32 to vector<16x1xf32>
    %13 = arith.divf %11, %12 : vector<16x1xf32>
    %cst_6 = arith.constant 9.99999974E-6 : f32
    %14 = vector.broadcast %cst_6 : f32 to vector<16x1xf32>
    %15 = arith.addf %13, %14 : vector<16x1xf32>
    %16 = math.rsqrt %15 : vector<16x1xf32>
    %17 = vector.broadcast %16 : vector<16x1xf32> to vector<16x32xf32>
    %18 = arith.mulf %8, %17 : vector<16x32xf32>
    %c0_7 = arith.constant 0 : index
    %c0_8 = arith.constant 0 : index
    %19 = vector.load %arg3[%c0_7, %c0_8] : memref<1x32xf32, #tpu.memory_space<vmem>>, vector<1x32xf32>
    %20 = vector.broadcast %19 : vector<1x32xf32> to vector<16x32xf32>
    %21 = arith.mulf %18, %20 : vector<16x32xf32>
    %c0_9 = arith.constant 0 : index
    %c0_10 = arith.constant 0 : index
    %22 = vector.load %arg4[%c0_9, %c0_10] : memref<1x32xf32, #tpu.memory_space<vmem>>, vector<1x32xf32>
    %23 = vector.broadcast %22 : vector<1x32xf32> to vector<16x32xf32>
    %24 = arith.addf %21, %23 : vector<16x32xf32>
    %c0_11 = arith.constant 0 : index
    %c0_12 = arith.constant 0 : index
    %25 = vector.load %arg5[%c0_11, %c0_12] : memref<16x32xf32, #tpu.memory_space<vmem>>, vector<16x32xf32>
    tpu.vector_store %arg5[%c0_11, %c0_12], %24 {strides = array<i32>} : memref<16x32xf32, #tpu.memory_space<vmem>>, vector<16x32xf32>,
    return
  }
  func.func @transform_0(%arg0: i32) -> (i32, i32) {
    %c0_i32 = arith.constant 0 : i32
    %c0_i32_0 = arith.constant 0 : i32
    return %arg0, %c0_i32 : i32, i32
  }
  func.func @transform_1(%arg0: i32) -> (i32, i32) {
    %c0_i32 = arith.constant 0 : i32
    %c0_i32_0 = arith.constant 0 : i32
    return %arg0, %c0_i32 : i32, i32
  }
  func.func @transform_2(%arg0: i32) -> (i32, i32) {
    %c0_i32 = arith.constant 0 : i32
    %c0_i32_0 = arith.constant 0 : i32
    %c0_i32_1 = arith.constant 0 : i32
    return %c0_i32, %c0_i32_0 : i32, i32
  }
  func.func @transform_3(%arg0: i32) -> (i32, i32) {
    %c0_i32 = arith.constant 0 : i32
    %c0_i32_0 = arith.constant 0 : i32
    %c0_i32_1 = arith.constant 0 : i32
    return %c0_i32, %c0_i32_0 : i32, i32
  }
  func.func @transform_4(%arg0: i32) -> (i32, i32) {
    %c0_i32 = arith.constant 0 : i32
    %c0_i32_0 = arith.constant 0 : i32
    return %arg0, %c0_i32 : i32, i32
  }
}

module attributes {stable_mosaic.version = 11 : i64} {
  func.func @kernel(%arg0: i32, %arg1: memref<1x8x96xf32, #tpu.memory_space<vmem>>, %arg2: memref<32x32xf32, #tpu.memory_space<vmem>>, %arg3: memref<1x32xf32, #tpu.memory_space<vmem>>, %arg4: memref<1x8x32xf32, #tpu.memory_space<vmem>>, %arg5: memref<8x32xf32, #tpu.memory_space<vmem>>) attributes {dimension_semantics = [#tpu.dimension_semantics<parallel>], iteration_bounds = array<i64: 2>, scalar_prefetch = 0 : i64, scratch_operands = 1 : i64, tpu.core_type = #tpu.core_type<tc>, window_params = [{transform_indices = @transform_0, window_bounds = array<i64: 1, 8, 96>}, {pipeline_mode = #tpu.pipeline_mode<synchronous>, transform_indices = @transform_1, window_bounds = array<i64: 32, 32>}, {pipeline_mode = #tpu.pipeline_mode<synchronous>, transform_indices = @transform_2, window_bounds = array<i64: 1, 32>}, {transform_indices = @transform_3, window_bounds = array<i64: 1, 8, 32>}]} {
    %0 = tpu.iota {dimensions = array<i32: 0>} : vector<8x8xi32>
    %1 = tpu.iota {dimensions = array<i32: 1>} : vector<8x8xi32>
    %2 = arith.cmpi sle, %1, %0 : vector<8x8xi32>
    %c0 = arith.constant 0 : index
    %c0_0 = arith.constant 0 : index
    %c0_1 = arith.constant 0 : index
    %3 = vector.load %arg1[%c0, %c0_0, %c0_1] : memref<1x8x96xf32, #tpu.memory_space<vmem>>, vector<1x8x8xf32>
    %4 = vector.shape_cast %3 : vector<1x8x8xf32> to vector<8x8xf32>
    %cst = arith.constant 0.353553385 : f32
    %5 = vector.broadcast %cst : f32 to vector<8x8xf32>
    %6 = arith.mulf %4, %5 : vector<8x8xf32>
    %c0_2 = arith.constant 0 : index
    %c0_3 = arith.constant 0 : index
    %c32 = arith.constant 32 : index
    %7 = vector.load %arg1[%c0_2, %c0_3, %c32] : memref<1x8x96xf32, #tpu.memory_space<vmem>>, vector<1x8x8xf32>
    %8 = vector.shape_cast %7 : vector<1x8x8xf32> to vector<8x8xf32>
    %c0_4 = arith.constant 0 : index
    %c0_5 = arith.constant 0 : index
    %c64 = arith.constant 64 : index
    %9 = vector.load %arg1[%c0_4, %c0_5, %c64] : memref<1x8x96xf32, #tpu.memory_space<vmem>>, vector<1x8x8xf32>
    %10 = vector.shape_cast %9 : vector<1x8x8xf32> to vector<8x8xf32>
    %11 = tpu.transpose %8, [1, 0] : vector<8x8xf32> -> vector<8x8xf32>
    %cst_6 = arith.constant dense<0.000000e+00> : vector<8x8xf32>
    %12 = tpu.matmul %6, %11, %cst_6 {dimension_numbers = #tpu.dot_dimension_numbers<[1], [0], [0], [1], [0, 0, 1, 1], [], []>} : vector<8x8xf32>, vector<8x8xf32>, vector<8x8xf32> -> vector<8x8xf32>
    %cst_7 = arith.constant -1.000000e+09 : f32
    %13 = vector.broadcast %cst_7 : f32 to vector<8x8xf32>
    %14 = arith.select %2, %12, %13 : vector<8x8xi1>, vector<8x8xf32>
    %cst_8 = arith.constant dense<0xFF800000> : vector<8xf32>
    %15 = vector.multi_reduction <maximumf>, %14, %cst_8 [1] : vector<8x8xf32> to vector<8xf32>
    %16 = vector.shape_cast %15 : vector<8xf32> to vector<8x1xf32>
    %17 = vector.broadcast %16 : vector<8x1xf32> to vector<8x8xf32>
    %18 = arith.subf %14, %17 : vector<8x8xf32>
    %19 = math.exp %18 : vector<8x8xf32>
    %cst_9 = arith.constant dense<0.000000e+00> : vector<8xf32>
    %20 = vector.multi_reduction <add>, %19, %cst_9 [1] : vector<8x8xf32> to vector<8xf32>
    %21 = vector.shape_cast %20 : vector<8xf32> to vector<8x1xf32>
    %22 = tpu.reciprocal %21 {approx = true} : vector<8x1xf32> -> vector<8x1xf32>
    %23 = vector.broadcast %22 : vector<8x1xf32> to vector<8x8xf32>
    %24 = arith.mulf %19, %23 : vector<8x8xf32>
    %cst_10 = arith.constant dense<0.000000e+00> : vector<8x8xf32>
    %25 = tpu.matmul %24, %10, %cst_10 {dimension_numbers = #tpu.dot_dimension_numbers<[1], [0], [0], [1], [0, 0, 1, 1], [], []>} : vector<8x8xf32>, vector<8x8xf32>, vector<8x8xf32> -> vector<8x8xf32>
    %c0_11 = arith.constant 0 : index
    %c0_12 = arith.constant 0 : index
    %26 = vector.load %arg5[%c0_11, %c0_12] : memref<8x32xf32, #tpu.memory_space<vmem>>, vector<8x8xf32>
    tpu.vector_store %arg5[%c0_11, %c0_12], %25 {strides = array<i32>} : memref<8x32xf32, #tpu.memory_space<vmem>>, vector<8x8xf32>,
    %c0_13 = arith.constant 0 : index
    %c0_14 = arith.constant 0 : index
    %c8 = arith.constant 8 : index
    %27 = vector.load %arg1[%c0_13, %c0_14, %c8] : memref<1x8x96xf32, #tpu.memory_space<vmem>>, vector<1x8x8xf32>
    %28 = vector.shape_cast %27 : vector<1x8x8xf32> to vector<8x8xf32>
    %cst_15 = arith.constant 0.353553385 : f32
    %29 = vector.broadcast %cst_15 : f32 to vector<8x8xf32>
    %30 = arith.mulf %28, %29 : vector<8x8xf32>
    %c0_16 = arith.constant 0 : index
    %c0_17 = arith.constant 0 : index
    %c40 = arith.constant 40 : index
    %31 = vector.load %arg1[%c0_16, %c0_17, %c40] : memref<1x8x96xf32, #tpu.memory_space<vmem>>, vector<1x8x8xf32>
    %32 = vector.shape_cast %31 : vector<1x8x8xf32> to vector<8x8xf32>
    %c0_18 = arith.constant 0 : index
    %c0_19 = arith.constant 0 : index
    %c72 = arith.constant 72 : index
    %33 = vector.load %arg1[%c0_18, %c0_19, %c72] : memref<1x8x96xf32, #tpu.memory_space<vmem>>, vector<1x8x8xf32>
    %34 = vector.shape_cast %33 : vector<1x8x8xf32> to vector<8x8xf32>
    %35 = tpu.transpose %32, [1, 0] : vector<8x8xf32> -> vector<8x8xf32>
    %cst_20 = arith.constant dense<0.000000e+00> : vector<8x8xf32>
    %36 = tpu.matmul %30, %35, %cst_20 {dimension_numbers = #tpu.dot_dimension_numbers<[1], [0], [0], [1], [0, 0, 1, 1], [], []>} : vector<8x8xf32>, vector<8x8xf32>, vector<8x8xf32> -> vector<8x8xf32>
    %cst_21 = arith.constant -1.000000e+09 : f32
    %37 = vector.broadcast %cst_21 : f32 to vector<8x8xf32>
    %38 = arith.select %2, %36, %37 : vector<8x8xi1>, vector<8x8xf32>
    %cst_22 = arith.constant dense<0xFF800000> : vector<8xf32>
    %39 = vector.multi_reduction <maximumf>, %38, %cst_22 [1] : vector<8x8xf32> to vector<8xf32>
    %40 = vector.shape_cast %39 : vector<8xf32> to vector<8x1xf32>
    %41 = vector.broadcast %40 : vector<8x1xf32> to vector<8x8xf32>
    %42 = arith.subf %38, %41 : vector<8x8xf32>
    %43 = math.exp %42 : vector<8x8xf32>
    %cst_23 = arith.constant dense<0.000000e+00> : vector<8xf32>
    %44 = vector.multi_reduction <add>, %43, %cst_23 [1] : vector<8x8xf32> to vector<8xf32>
    %45 = vector.shape_cast %44 : vector<8xf32> to vector<8x1xf32>
    %46 = tpu.reciprocal %45 {approx = true} : vector<8x1xf32> -> vector<8x1xf32>
    %47 = vector.broadcast %46 : vector<8x1xf32> to vector<8x8xf32>
    %48 = arith.mulf %43, %47 : vector<8x8xf32>
    %cst_24 = arith.constant dense<0.000000e+00> : vector<8x8xf32>
    %49 = tpu.matmul %48, %34, %cst_24 {dimension_numbers = #tpu.dot_dimension_numbers<[1], [0], [0], [1], [0, 0, 1, 1], [], []>} : vector<8x8xf32>, vector<8x8xf32>, vector<8x8xf32> -> vector<8x8xf32>
    %c0_25 = arith.constant 0 : index
    %c8_26 = arith.constant 8 : index
    %50 = vector.load %arg5[%c0_25, %c8_26] : memref<8x32xf32, #tpu.memory_space<vmem>>, vector<8x8xf32>
    tpu.vector_store %arg5[%c0_25, %c8_26], %49 {strides = array<i32>} : memref<8x32xf32, #tpu.memory_space<vmem>>, vector<8x8xf32>,
    %c0_27 = arith.constant 0 : index
    %c0_28 = arith.constant 0 : index
    %c16 = arith.constant 16 : index
    %51 = vector.load %arg1[%c0_27, %c0_28, %c16] : memref<1x8x96xf32, #tpu.memory_space<vmem>>, vector<1x8x8xf32>
    %52 = vector.shape_cast %51 : vector<1x8x8xf32> to vector<8x8xf32>
    %cst_29 = arith.constant 0.353553385 : f32
    %53 = vector.broadcast %cst_29 : f32 to vector<8x8xf32>
    %54 = arith.mulf %52, %53 : vector<8x8xf32>
    %c0_30 = arith.constant 0 : index
    %c0_31 = arith.constant 0 : index
    %c48 = arith.constant 48 : index
    %55 = vector.load %arg1[%c0_30, %c0_31, %c48] : memref<1x8x96xf32, #tpu.memory_space<vmem>>, vector<1x8x8xf32>
    %56 = vector.shape_cast %55 : vector<1x8x8xf32> to vector<8x8xf32>
    %c0_32 = arith.constant 0 : index
    %c0_33 = arith.constant 0 : index
    %c80 = arith.constant 80 : index
    %57 = vector.load %arg1[%c0_32, %c0_33, %c80] : memref<1x8x96xf32, #tpu.memory_space<vmem>>, vector<1x8x8xf32>
    %58 = vector.shape_cast %57 : vector<1x8x8xf32> to vector<8x8xf32>
    %59 = tpu.transpose %56, [1, 0] : vector<8x8xf32> -> vector<8x8xf32>
    %cst_34 = arith.constant dense<0.000000e+00> : vector<8x8xf32>
    %60 = tpu.matmul %54, %59, %cst_34 {dimension_numbers = #tpu.dot_dimension_numbers<[1], [0], [0], [1], [0, 0, 1, 1], [], []>} : vector<8x8xf32>, vector<8x8xf32>, vector<8x8xf32> -> vector<8x8xf32>
    %cst_35 = arith.constant -1.000000e+09 : f32
    %61 = vector.broadcast %cst_35 : f32 to vector<8x8xf32>
    %62 = arith.select %2, %60, %61 : vector<8x8xi1>, vector<8x8xf32>
    %cst_36 = arith.constant dense<0xFF800000> : vector<8xf32>
    %63 = vector.multi_reduction <maximumf>, %62, %cst_36 [1] : vector<8x8xf32> to vector<8xf32>
    %64 = vector.shape_cast %63 : vector<8xf32> to vector<8x1xf32>
    %65 = vector.broadcast %64 : vector<8x1xf32> to vector<8x8xf32>
    %66 = arith.subf %62, %65 : vector<8x8xf32>
    %67 = math.exp %66 : vector<8x8xf32>
    %cst_37 = arith.constant dense<0.000000e+00> : vector<8xf32>
    %68 = vector.multi_reduction <add>, %67, %cst_37 [1] : vector<8x8xf32> to vector<8xf32>
    %69 = vector.shape_cast %68 : vector<8xf32> to vector<8x1xf32>
    %70 = tpu.reciprocal %69 {approx = true} : vector<8x1xf32> -> vector<8x1xf32>
    %71 = vector.broadcast %70 : vector<8x1xf32> to vector<8x8xf32>
    %72 = arith.mulf %67, %71 : vector<8x8xf32>
    %cst_38 = arith.constant dense<0.000000e+00> : vector<8x8xf32>
    %73 = tpu.matmul %72, %58, %cst_38 {dimension_numbers = #tpu.dot_dimension_numbers<[1], [0], [0], [1], [0, 0, 1, 1], [], []>} : vector<8x8xf32>, vector<8x8xf32>, vector<8x8xf32> -> vector<8x8xf32>
    %c0_39 = arith.constant 0 : index
    %c16_40 = arith.constant 16 : index
    %74 = vector.load %arg5[%c0_39, %c16_40] : memref<8x32xf32, #tpu.memory_space<vmem>>, vector<8x8xf32>
    tpu.vector_store %arg5[%c0_39, %c16_40], %73 {strides = array<i32>} : memref<8x32xf32, #tpu.memory_space<vmem>>, vector<8x8xf32>,
    %c0_41 = arith.constant 0 : index
    %c0_42 = arith.constant 0 : index
    %c24 = arith.constant 24 : index
    %75 = vector.load %arg1[%c0_41, %c0_42, %c24] : memref<1x8x96xf32, #tpu.memory_space<vmem>>, vector<1x8x8xf32>
    %76 = vector.shape_cast %75 : vector<1x8x8xf32> to vector<8x8xf32>
    %cst_43 = arith.constant 0.353553385 : f32
    %77 = vector.broadcast %cst_43 : f32 to vector<8x8xf32>
    %78 = arith.mulf %76, %77 : vector<8x8xf32>
    %c0_44 = arith.constant 0 : index
    %c0_45 = arith.constant 0 : index
    %c56 = arith.constant 56 : index
    %79 = vector.load %arg1[%c0_44, %c0_45, %c56] : memref<1x8x96xf32, #tpu.memory_space<vmem>>, vector<1x8x8xf32>
    %80 = vector.shape_cast %79 : vector<1x8x8xf32> to vector<8x8xf32>
    %c0_46 = arith.constant 0 : index
    %c0_47 = arith.constant 0 : index
    %c88 = arith.constant 88 : index
    %81 = vector.load %arg1[%c0_46, %c0_47, %c88] : memref<1x8x96xf32, #tpu.memory_space<vmem>>, vector<1x8x8xf32>
    %82 = vector.shape_cast %81 : vector<1x8x8xf32> to vector<8x8xf32>
    %83 = tpu.transpose %80, [1, 0] : vector<8x8xf32> -> vector<8x8xf32>
    %cst_48 = arith.constant dense<0.000000e+00> : vector<8x8xf32>
    %84 = tpu.matmul %78, %83, %cst_48 {dimension_numbers = #tpu.dot_dimension_numbers<[1], [0], [0], [1], [0, 0, 1, 1], [], []>} : vector<8x8xf32>, vector<8x8xf32>, vector<8x8xf32> -> vector<8x8xf32>
    %cst_49 = arith.constant -1.000000e+09 : f32
    %85 = vector.broadcast %cst_49 : f32 to vector<8x8xf32>
    %86 = arith.select %2, %84, %85 : vector<8x8xi1>, vector<8x8xf32>
    %cst_50 = arith.constant dense<0xFF800000> : vector<8xf32>
    %87 = vector.multi_reduction <maximumf>, %86, %cst_50 [1] : vector<8x8xf32> to vector<8xf32>
    %88 = vector.shape_cast %87 : vector<8xf32> to vector<8x1xf32>
    %89 = vector.broadcast %88 : vector<8x1xf32> to vector<8x8xf32>
    %90 = arith.subf %86, %89 : vector<8x8xf32>
    %91 = math.exp %90 : vector<8x8xf32>
    %cst_51 = arith.constant dense<0.000000e+00> : vector<8xf32>
    %92 = vector.multi_reduction <add>, %91, %cst_51 [1] : vector<8x8xf32> to vector<8xf32>
    %93 = vector.shape_cast %92 : vector<8xf32> to vector<8x1xf32>
    %94 = tpu.reciprocal %93 {approx = true} : vector<8x1xf32> -> vector<8x1xf32>
    %95 = vector.broadcast %94 : vector<8x1xf32> to vector<8x8xf32>
    %96 = arith.mulf %91, %95 : vector<8x8xf32>
    %cst_52 = arith.constant dense<0.000000e+00> : vector<8x8xf32>
    %97 = tpu.matmul %96, %82, %cst_52 {dimension_numbers = #tpu.dot_dimension_numbers<[1], [0], [0], [1], [0, 0, 1, 1], [], []>} : vector<8x8xf32>, vector<8x8xf32>, vector<8x8xf32> -> vector<8x8xf32>
    %c0_53 = arith.constant 0 : index
    %c24_54 = arith.constant 24 : index
    %98 = vector.load %arg5[%c0_53, %c24_54] : memref<8x32xf32, #tpu.memory_space<vmem>>, vector<8x8xf32>
    tpu.vector_store %arg5[%c0_53, %c24_54], %97 {strides = array<i32>} : memref<8x32xf32, #tpu.memory_space<vmem>>, vector<8x8xf32>,
    %c0_55 = arith.constant 0 : index
    %c0_56 = arith.constant 0 : index
    %99 = vector.load %arg5[%c0_55, %c0_56] : memref<8x32xf32, #tpu.memory_space<vmem>>, vector<8x32xf32>
    %c0_57 = arith.constant 0 : index
    %c0_58 = arith.constant 0 : index
    %100 = vector.load %arg2[%c0_57, %c0_58] : memref<32x32xf32, #tpu.memory_space<vmem>>, vector<32x32xf32>
    %cst_59 = arith.constant dense<0.000000e+00> : vector<8x32xf32>
    %101 = tpu.matmul %99, %100, %cst_59 {dimension_numbers = #tpu.dot_dimension_numbers<[1], [0], [0], [1], [0, 0, 1, 1], [], []>} : vector<8x32xf32>, vector<32x32xf32>, vector<8x32xf32> -> vector<8x32xf32>
    %c0_60 = arith.constant 0 : index
    %c0_61 = arith.constant 0 : index
    %102 = vector.load %arg3[%c0_60, %c0_61] : memref<1x32xf32, #tpu.memory_space<vmem>>, vector<1x32xf32>
    %103 = vector.broadcast %102 : vector<1x32xf32> to vector<8x32xf32>
    %104 = arith.addf %101, %103 : vector<8x32xf32>
    %c0_62 = arith.constant 0 : index
    %c0_63 = arith.constant 0 : index
    %c0_64 = arith.constant 0 : index
    %105 = vector.load %arg4[%c0_62, %c0_63, %c0_64] : memref<1x8x32xf32, #tpu.memory_space<vmem>>, vector<1x8x32xf32>
    %106 = vector.shape_cast %105 : vector<1x8x32xf32> to vector<8x32xf32>
    %107 = vector.shape_cast %104 : vector<8x32xf32> to vector<1x8x32xf32>
    tpu.vector_store %arg4[%c0_62, %c0_63, %c0_64], %107 {strides = array<i32>} : memref<1x8x32xf32, #tpu.memory_space<vmem>>, vector<1x8x32xf32>,
    return
  }
  func.func @transform_0(%arg0: i32) -> (i32, i32, i32) {
    %c0_i32 = arith.constant 0 : i32
    %c0_i32_0 = arith.constant 0 : i32
    %c0_i32_1 = arith.constant 0 : i32
    return %arg0, %c0_i32, %c0_i32_0 : i32, i32, i32
  }
  func.func @transform_1(%arg0: i32) -> (i32, i32) {
    %c0_i32 = arith.constant 0 : i32
    %c0_i32_0 = arith.constant 0 : i32
    %c0_i32_1 = arith.constant 0 : i32
    return %c0_i32, %c0_i32_0 : i32, i32
  }
  func.func @transform_2(%arg0: i32) -> (i32, i32) {
    %c0_i32 = arith.constant 0 : i32
    %c0_i32_0 = arith.constant 0 : i32
    %c0_i32_1 = arith.constant 0 : i32
    return %c0_i32, %c0_i32_0 : i32, i32
  }
  func.func @transform_3(%arg0: i32) -> (i32, i32, i32) {
    %c0_i32 = arith.constant 0 : i32
    %c0_i32_0 = arith.constant 0 : i32
    %c0_i32_1 = arith.constant 0 : i32
    return %arg0, %c0_i32, %c0_i32_0 : i32, i32, i32
  }
}

module attributes {stable_mosaic.version = 11 : i64} {
  func.func @kernel(%arg0: i32, %arg1: i32, %arg2: i32, %arg3: memref<16x32xf32, #tpu.memory_space<vmem>>, %arg4: memref<32x64xf32, #tpu.memory_space<vmem>>, %arg5: memref<1x64xf32, #tpu.memory_space<vmem>>, %arg6: memref<16x64xf32, #tpu.memory_space<vmem>>, %arg7: memref<16x64xf32, #tpu.memory_space<vmem>>) attributes {dimension_semantics = [#tpu.dimension_semantics<parallel>, #tpu.dimension_semantics<parallel>, #tpu.dimension_semantics<arbitrary>], iteration_bounds = array<i64: 1, 1, 1>, scalar_prefetch = 0 : i64, scratch_operands = 1 : i64, tpu.core_type = #tpu.core_type<tc>, window_params = [{transform_indices = @transform_0, window_bounds = array<i64: 16, 32>}, {transform_indices = @transform_1, window_bounds = array<i64: 32, 64>}, {transform_indices = @transform_2, window_bounds = array<i64: 1, 64>}, {transform_indices = @transform_3, window_bounds = array<i64: 16, 64>}]} {
    %c0_i32 = arith.constant 0 : i32
    %0 = arith.cmpi eq, %arg2, %c0_i32 : i32
    %1 = arith.extui %0 : i1 to i32
    %c0_i32_0 = arith.constant 0 : i32
    %2 = arith.cmpi ne, %1, %c0_i32_0 : i32
    scf.if %2 {
      %cst_10 = arith.constant 0.000000e+00 : f32
      %12 = vector.broadcast %cst_10 : f32 to vector<16x64xf32>
      %c0_11 = arith.constant 0 : index
      %c0_12 = arith.constant 0 : index
      %13 = vector.load %arg7[%c0_11, %c0_12] : memref<16x64xf32, #tpu.memory_space<vmem>>, vector<16x64xf32>
      tpu.vector_store %arg7[%c0_11, %c0_12], %12 {strides = array<i32>} : memref<16x64xf32, #tpu.memory_space<vmem>>, vector<16x64xf32>,
    } else {
    }
    %c0 = arith.constant 0 : index
    %c0_1 = arith.constant 0 : index
    %3 = vector.load %arg7[%c0, %c0_1] : memref<16x64xf32, #tpu.memory_space<vmem>>, vector<16x64xf32>
    %c0_2 = arith.constant 0 : index
    %c0_3 = arith.constant 0 : index
    %4 = vector.load %arg3[%c0_2, %c0_3] : memref<16x32xf32, #tpu.memory_space<vmem>>, vector<16x32xf32>
    %c0_4 = arith.constant 0 : index
    %c0_5 = arith.constant 0 : index
    %5 = vector.load %arg4[%c0_4, %c0_5] : memref<32x64xf32, #tpu.memory_space<vmem>>, vector<32x64xf32>
    %cst = arith.constant dense<0.000000e+00> : vector<16x64xf32>
    %6 = tpu.matmul %4, %5, %cst {dimension_numbers = #tpu.dot_dimension_numbers<[1], [0], [0], [1], [0, 0, 1, 1], [], []>} : vector<16x32xf32>, vector<32x64xf32>, vector<16x64xf32> -> vector<16x64xf32>
    %7 = arith.addf %3, %6 : vector<16x64xf32>
    %c0_6 = arith.constant 0 : index
    %c0_7 = arith.constant 0 : index
    %8 = vector.load %arg7[%c0_6, %c0_7] : memref<16x64xf32, #tpu.memory_space<vmem>>, vector<16x64xf32>
    tpu.vector_store %arg7[%c0_6, %c0_7], %7 {strides = array<i32>} : memref<16x64xf32, #tpu.memory_space<vmem>>, vector<16x64xf32>,
    %c0_i32_8 = arith.constant 0 : i32
    %9 = arith.cmpi eq, %arg2, %c0_i32_8 : i32
    %10 = arith.extui %9 : i1 to i32
    %c0_i32_9 = arith.constant 0 : i32
    %11 = arith.cmpi ne, %10, %c0_i32_9 : i32
    scf.if %11 {
      %c0_10 = arith.constant 0 : index
      %c0_11 = arith.constant 0 : index
      %12 = vector.load %arg7[%c0_10, %c0_11] : memref<16x64xf32, #tpu.memory_space<vmem>>, vector<16x64xf32>
      %c0_12 = arith.constant 0 : index
      %c0_13 = arith.constant 0 : index
      %13 = vector.load %arg5[%c0_12, %c0_13] : memref<1x64xf32, #tpu.memory_space<vmem>>, vector<1x64xf32>
      %14 = vector.broadcast %13 : vector<1x64xf32> to vector<16x64xf32>
      %15 = arith.addf %12, %14 : vector<16x64xf32>
      %16 = arith.mulf %15, %15 : vector<16x64xf32>
      %17 = arith.mulf %15, %16 : vector<16x64xf32>
      %cst_14 = arith.constant 4.471500e-02 : f32
      %18 = vector.broadcast %cst_14 : f32 to vector<16x64xf32>
      %19 = arith.mulf %18, %17 : vector<16x64xf32>
      %20 = arith.addf %15, %19 : vector<16x64xf32>
      %cst_15 = arith.constant 0.797884583 : f32
      %21 = vector.broadcast %cst_15 : f32 to vector<16x64xf32>
      %22 = arith.mulf %21, %20 : vector<16x64xf32>
      %23 = math.tanh %22 : vector<16x64xf32>
      %cst_16 = arith.constant 1.000000e+00 : f32
      %24 = vector.broadcast %cst_16 : f32 to vector<16x64xf32>
      %25 = arith.addf %24, %23 : vector<16x64xf32>
      %cst_17 = arith.constant 5.000000e-01 : f32
      %26 = vector.broadcast %cst_17 : f32 to vector<16x64xf32>
      %27 = arith.mulf %26, %25 : vector<16x64xf32>
      %28 = arith.mulf %15, %27 : vector<16x64xf32>
      %c0_18 = arith.constant 0 : index
      %c0_19 = arith.constant 0 : index
      %29 = vector.load %arg6[%c0_18, %c0_19] : memref<16x64xf32, #tpu.memory_space<vmem>>, vector<16x64xf32>
      tpu.vector_store %arg6[%c0_18, %c0_19], %28 {strides = array<i32>} : memref<16x64xf32, #tpu.memory_space<vmem>>, vector<16x64xf32>,
    } else {
    }
    return
  }
  func.func @transform_0(%arg0: i32, %arg1: i32, %arg2: i32) -> (i32, i32) {
    %c0_i32 = arith.constant 0 : i32
    return %arg0, %arg2 : i32, i32
  }
  func.func @transform_1(%arg0: i32, %arg1: i32, %arg2: i32) -> (i32, i32) {
    %c0_i32 = arith.constant 0 : i32
    return %arg2, %arg1 : i32, i32
  }
  func.func @transform_2(%arg0: i32, %arg1: i32, %arg2: i32) -> (i32, i32) {
    %c0_i32 = arith.constant 0 : i32
    %c0_i32_0 = arith.constant 0 : i32
    return %c0_i32, %arg1 : i32, i32
  }
  func.func @transform_3(%arg0: i32, %arg1: i32, %arg2: i32) -> (i32, i32) {
    %c0_i32 = arith.constant 0 : i32
    return %arg0, %arg1 : i32, i32
  }
}

module attributes {stable_mosaic.version = 11 : i64} {
  func.func @kernel(%arg0: i32, %arg1: i32, %arg2: i32, %arg3: memref<16x32xf32, #tpu.memory_space<vmem>>, %arg4: memref<32x64xf32, #tpu.memory_space<vmem>>, %arg5: memref<1x64xf32, #tpu.memory_space<vmem>>, %arg6: memref<16x64xf32, #tpu.memory_space<vmem>>, %arg7: memref<16x64xf32, #tpu.memory_space<vmem>>) attributes {dimension_semantics = [#tpu.dimension_semantics<parallel>, #tpu.dimension_semantics<parallel>, #tpu.dimension_semantics<arbitrary>], iteration_bounds = array<i64: 1, 1, 1>, scalar_prefetch = 0 : i64, scratch_operands = 1 : i64, tpu.core_type = #tpu.core_type<tc>, window_params = [{transform_indices = @transform_0, window_bounds = array<i64: 16, 32>}, {transform_indices = @transform_1, window_bounds = array<i64: 32, 64>}, {transform_indices = @transform_2, window_bounds = array<i64: 1, 64>}, {transform_indices = @transform_3, window_bounds = array<i64: 16, 64>}]} {
    %c0_i32 = arith.constant 0 : i32
    %0 = arith.cmpi eq, %arg2, %c0_i32 : i32
    %1 = arith.extui %0 : i1 to i32
    %c0_i32_0 = arith.constant 0 : i32
    %2 = arith.cmpi ne, %1, %c0_i32_0 : i32
    scf.if %2 {
      %cst_10 = arith.constant 0.000000e+00 : f32
      %12 = vector.broadcast %cst_10 : f32 to vector<16x64xf32>
      %c0_11 = arith.constant 0 : index
      %c0_12 = arith.constant 0 : index
      %13 = vector.load %arg7[%c0_11, %c0_12] : memref<16x64xf32, #tpu.memory_space<vmem>>, vector<16x64xf32>
      tpu.vector_store %arg7[%c0_11, %c0_12], %12 {strides = array<i32>} : memref<16x64xf32, #tpu.memory_space<vmem>>, vector<16x64xf32>,
    } else {
    }
    %c0 = arith.constant 0 : index
    %c0_1 = arith.constant 0 : index
    %3 = vector.load %arg7[%c0, %c0_1] : memref<16x64xf32, #tpu.memory_space<vmem>>, vector<16x64xf32>
    %c0_2 = arith.constant 0 : index
    %c0_3 = arith.constant 0 : index
    %4 = vector.load %arg3[%c0_2, %c0_3] : memref<16x32xf32, #tpu.memory_space<vmem>>, vector<16x32xf32>
    %c0_4 = arith.constant 0 : index
    %c0_5 = arith.constant 0 : index
    %5 = vector.load %arg4[%c0_4, %c0_5] : memref<32x64xf32, #tpu.memory_space<vmem>>, vector<32x64xf32>
    %cst = arith.constant dense<0.000000e+00> : vector<16x64xf32>
    %6 = tpu.matmul %4, %5, %cst {dimension_numbers = #tpu.dot_dimension_numbers<[1], [0], [0], [1], [0, 0, 1, 1], [], []>} : vector<16x32xf32>, vector<32x64xf32>, vector<16x64xf32> -> vector<16x64xf32>
    %7 = arith.addf %3, %6 : vector<16x64xf32>
    %c0_6 = arith.constant 0 : index
    %c0_7 = arith.constant 0 : index
    %8 = vector.load %arg7[%c0_6, %c0_7] : memref<16x64xf32, #tpu.memory_space<vmem>>, vector<16x64xf32>
    tpu.vector_store %arg7[%c0_6, %c0_7], %7 {strides = array<i32>} : memref<16x64xf32, #tpu.memory_space<vmem>>, vector<16x64xf32>,
    %c0_i32_8 = arith.constant 0 : i32
    %9 = arith.cmpi eq, %arg2, %c0_i32_8 : i32
    %10 = arith.extui %9 : i1 to i32
    %c0_i32_9 = arith.constant 0 : i32
    %11 = arith.cmpi ne, %10, %c0_i32_9 : i32
    scf.if %11 {
      %c0_10 = arith.constant 0 : index
      %c0_11 = arith.constant 0 : index
      %12 = vector.load %arg7[%c0_10, %c0_11] : memref<16x64xf32, #tpu.memory_space<vmem>>, vector<16x64xf32>
      %c0_12 = arith.constant 0 : index
      %c0_13 = arith.constant 0 : index
      %13 = vector.load %arg5[%c0_12, %c0_13] : memref<1x64xf32, #tpu.memory_space<vmem>>, vector<1x64xf32>
      %14 = vector.broadcast %13 : vector<1x64xf32> to vector<16x64xf32>
      %15 = arith.addf %12, %14 : vector<16x64xf32>
      %c0_14 = arith.constant 0 : index
      %c0_15 = arith.constant 0 : index
      %16 = vector.load %arg6[%c0_14, %c0_15] : memref<16x64xf32, #tpu.memory_space<vmem>>, vector<16x64xf32>
      tpu.vector_store %arg6[%c0_14, %c0_15], %15 {strides = array<i32>} : memref<16x64xf32, #tpu.memory_space<vmem>>, vector<16x64xf32>,
    } else {
    }
    return
  }
  func.func @transform_0(%arg0: i32, %arg1: i32, %arg2: i32) -> (i32, i32) {
    %c0_i32 = arith.constant 0 : i32
    return %arg0, %arg2 : i32, i32
  }
  func.func @transform_1(%arg0: i32, %arg1: i32, %arg2: i32) -> (i32, i32) {
    %c0_i32 = arith.constant 0 : i32
    return %arg2, %arg1 : i32, i32
  }
  func.func @transform_2(%arg0: i32, %arg1: i32, %arg2: i32) -> (i32, i32) {
    %c0_i32 = arith.constant 0 : i32
    %c0_i32_0 = arith.constant 0 : i32
    return %c0_i32, %arg1 : i32, i32
  }
  func.func @transform_3(%arg0: i32, %arg1: i32, %arg2: i32) -> (i32, i32) {
    %c0_i32 = arith.constant 0 : i32
    return %arg0, %arg1 : i32, i32
  }
}

module attributes {stable_mosaic.version = 11 : i64} {
  func.func @kernel(%arg0: i32, %arg1: i32, %arg2: i32, %arg3: memref<16x64xf32, #tpu.memory_space<vmem>>, %arg4: memref<64x32xf32, #tpu.memory_space<vmem>>, %arg5: memref<1x32xf32, #tpu.memory_space<vmem>>, %arg6: memref<16x32xf32, #tpu.memory_space<vmem>>, %arg7: memref<16x32xf32, #tpu.memory_space<vmem>>) attributes {dimension_semantics = [#tpu.dimension_semantics<parallel>, #tpu.dimension_semantics<parallel>, #tpu.dimension_semantics<arbitrary>], iteration_bounds = array<i64: 1, 1, 1>, scalar_prefetch = 0 : i64, scratch_operands = 1 : i64, tpu.core_type = #tpu.core_type<tc>, window_params = [{transform_indices = @transform_0, window_bounds = array<i64: 16, 64>}, {transform_indices = @transform_1, window_bounds = array<i64: 64, 32>}, {transform_indices = @transform_2, window_bounds = array<i64: 1, 32>}, {transform_indices = @transform_3, window_bounds = array<i64: 16, 32>}]} {
    %c0_i32 = arith.constant 0 : i32
    %0 = arith.cmpi eq, %arg2, %c0_i32 : i32
    %1 = arith.extui %0 : i1 to i32
    %c0_i32_0 = arith.constant 0 : i32
    %2 = arith.cmpi ne, %1, %c0_i32_0 : i32
    scf.if %2 {
      %cst_10 = arith.constant 0.000000e+00 : f32
      %12 = vector.broadcast %cst_10 : f32 to vector<16x32xf32>
      %c0_11 = arith.constant 0 : index
      %c0_12 = arith.constant 0 : index
      %13 = vector.load %arg7[%c0_11, %c0_12] : memref<16x32xf32, #tpu.memory_space<vmem>>, vector<16x32xf32>
      tpu.vector_store %arg7[%c0_11, %c0_12], %12 {strides = array<i32>} : memref<16x32xf32, #tpu.memory_space<vmem>>, vector<16x32xf32>,
    } else {
    }
    %c0 = arith.constant 0 : index
    %c0_1 = arith.constant 0 : index
    %3 = vector.load %arg7[%c0, %c0_1] : memref<16x32xf32, #tpu.memory_space<vmem>>, vector<16x32xf32>
    %c0_2 = arith.constant 0 : index
    %c0_3 = arith.constant 0 : index
    %4 = vector.load %arg3[%c0_2, %c0_3] : memref<16x64xf32, #tpu.memory_space<vmem>>, vector<16x64xf32>
    %c0_4 = arith.constant 0 : index
    %c0_5 = arith.constant 0 : index
    %5 = vector.load %arg4[%c0_4, %c0_5] : memref<64x32xf32, #tpu.memory_space<vmem>>, vector<64x32xf32>
    %cst = arith.constant dense<0.000000e+00> : vector<16x32xf32>
    %6 = tpu.matmul %4, %5, %cst {dimension_numbers = #tpu.dot_dimension_numbers<[1], [0], [0], [1], [0, 0, 1, 1], [], []>} : vector<16x64xf32>, vector<64x32xf32>, vector<16x32xf32> -> vector<16x32xf32>
    %7 = arith.addf %3, %6 : vector<16x32xf32>
    %c0_6 = arith.constant 0 : index
    %c0_7 = arith.constant 0 : index
    %8 = vector.load %arg7[%c0_6, %c0_7] : memref<16x32xf32, #tpu.memory_space<vmem>>, vector<16x32xf32>
    tpu.vector_store %arg7[%c0_6, %c0_7], %7 {strides = array<i32>} : memref<16x32xf32, #tpu.memory_space<vmem>>, vector<16x32xf32>,
    %c0_i32_8 = arith.constant 0 : i32
    %9 = arith.cmpi eq, %arg2, %c0_i32_8 : i32
    %10 = arith.extui %9 : i1 to i32
    %c0_i32_9 = arith.constant 0 : i32
    %11 = arith.cmpi ne, %10, %c0_i32_9 : i32
    scf.if %11 {
      %c0_10 = arith.constant 0 : index
      %c0_11 = arith.constant 0 : index
      %12 = vector.load %arg7[%c0_10, %c0_11] : memref<16x32xf32, #tpu.memory_space<vmem>>, vector<16x32xf32>
      %c0_12 = arith.constant 0 : index
      %c0_13 = arith.constant 0 : index
      %13 = vector.load %arg5[%c0_12, %c0_13] : memref<1x32xf32, #tpu.memory_space<vmem>>, vector<1x32xf32>
      %14 = vector.broadcast %13 : vector<1x32xf32> to vector<16x32xf32>
      %15 = arith.addf %12, %14 : vector<16x32xf32>
      %c0_14 = arith.constant 0 : index
      %c0_15 = arith.constant 0 : index
      %16 = vector.load %arg6[%c0_14, %c0_15] : memref<16x32xf32, #tpu.memory_space<vmem>>, vector<16x32xf32>
      tpu.vector_store %arg6[%c0_14, %c0_15], %15 {strides = array<i32>} : memref<16x32xf32, #tpu.memory_space<vmem>>, vector<16x32xf32>,
    } else {
    }
    return
  }
  func.func @transform_0(%arg0: i32, %arg1: i32, %arg2: i32) -> (i32, i32) {
    %c0_i32 = arith.constant 0 : i32
    return %arg0, %arg2 : i32, i32
  }
  func.func @transform_1(%arg0: i32, %arg1: i32, %arg2: i32) -> (i32, i32) {
    %c0_i32 = arith.constant 0 : i32
    return %arg2, %arg1 : i32, i32
  }
  func.func @transform_2(%arg0: i32, %arg1: i32, %arg2: i32) -> (i32, i32) {
    %c0_i32 = arith.constant 0 : i32
    %c0_i32_0 = arith.constant 0 : i32
    return %c0_i32, %arg1 : i32, i32
  }
  func.func @transform_3(%arg0: i32, %arg1: i32, %arg2: i32) -> (i32, i32) {
    %c0_i32 = arith.constant 0 : i32
    return %arg0, %arg1 : i32, i32
  }
}

</mosaic_0001>

<llo_original>
// kernel: gpt_forward.15
$region0: #{gpt_forward.15}
  #allocation0 [shape = 'u32[]', space=smem, size = 0x4, offset = 0x4, fixed_abs, tag = 'smem constant byte address 0x4 - core index']
  #allocation1 [shape = 'u32[72,128]{1,0:T(1,128)}', space=vmem, size = 0x9000, scoped, tag = 'internal scratch']
  %s0 = inlined_call_operand.vmem [shape: f32[16,32], index: 0, kind: input, shape index: {}]
  %s1 = inlined_call_operand.vmem [shape: f32[16,32], index: 1, kind: input, shape index: {}]
  %s2 = inlined_call_operand.vmem [shape: f32[1,32], index: 2, kind: input, shape index: {}]
  %s3 = inlined_call_operand.vmem [shape: f32[1,32], index: 3, kind: input, shape index: {}]
  %s4 = inlined_call_operand.vmem [shape: f32[16,32], index: 4, kind: output, shape index: {}]
  %s5 = sld [smem:[#allocation0]]
  $region26: #{gpt_forward.15} parent=0
    _
  %s7 = ssub.s32 1, %s5
  %s8 = scalar_select 0, %s7, %s5
  // Predicated region
  $region2: #{gpt_forward.15} parent=0 // pred_check
    _
  $region3: #{gpt_forward.15} parent=0 // pred_check_branch
    %10 = sbr.rel (0) target = $region5
  $region4: #{gpt_forward.15} parent=0 // pred_region
    _
  $region5: #{gpt_forward.15} parent=0 // pred_fallthru
    _
  // Predicated region
  $region6: #{gpt_forward.15} parent=0 // pred_check
    _
  $region7: #{gpt_forward.15} parent=0 // pred_check_branch
    %12 = sbr.rel (0) target = $region9
  $region8: #{gpt_forward.15} parent=0 // pred_region
    _
  $region9: #{gpt_forward.15} parent=0 // pred_fallthru
    _
  // Predicated region
  $region10: #{gpt_forward.15} parent=0 // pred_check
    _
  $region11: #{gpt_forward.15} parent=0 // pred_check_branch
    %14 = sbr.rel (0) target = $region13
  $region12: #{gpt_forward.15} parent=0 // pred_region
    _
  $region13: #{gpt_forward.15} parent=0 // pred_fallthru
    _
  // Predicated region
  $region14: #{gpt_forward.15} parent=0 // pred_check
    _
  $region15: #{gpt_forward.15} parent=0 // pred_check_branch
    %16 = sbr.rel (0) target = $region17
  $region16: #{gpt_forward.15} parent=0 // pred_region
    _
  $region17: #{gpt_forward.15} parent=0 // pred_fallthru
    _
  %v17 = vld [vmem:[%s0] sm:$0xff]
  %v18 = vld [vmem:[%s0 + $0x8] sm:$0xff]
  %v19 = vld [vmem:[%s1] sm:$0xff]
  %v20 = vld [vmem:[%s1 + $0x8] sm:$0xff]
  %v21 = vadd.f32 %v17, %v19
  %v22 = vadd.f32 %v18, %v20
  %vm23 = vcmask 261120
  %v24 = vsel %vm23, %v21, 0.0
  %25 = vadd.xlane.f32.xlu0 %v24
  %v26 = vpop.xlane.xlu0 %25
  %v27 = vsel %vm23, %v22, 0.0
  %28 = vadd.xlane.f32.xlu0 %v27
  %v29 = vpop.xlane.xlu0 %28
  %v30 = vrcp.pop 32.0
  %v31 = vmul.f32 32.0, %v30
  %v32 = vsub.f32 1.0, %v31
  %v33 = vmul.f32 %v30, %v32
  %v34 = vadd.f32 %v30, %v33
  %vm35 = vweird.f32 %v30
  %v36 = vsel %vm35, %v30, %v34
  %v37 = vmul.f32 %v26, %v36
  %v38 = vmul.f32 %v29, %v36
  %v39 = vsub.f32 %v21, %v37
  %v40 = vsub.f32 %v22, %v38
  %v41 = vmul.f32 %v39, %v39
  %v42 = vmul.f32 %v40, %v40
  %v43 = vsel %vm23, %v41, 0.0
  %44 = vadd.xlane.f32.xlu0 %v43
  %v45 = vpop.xlane.xlu0 %44
  %v46 = vsel %vm23, %v42, 0.0
  %47 = vadd.xlane.f32.xlu0 %v46
  %v48 = vpop.xlane.xlu0 %47
  %v49 = vmul.f32 %v45, %v36
  %v50 = vmul.f32 %v48, %v36
  %v51 = vadd.f32 %v49, 1e-05
  %v52 = vadd.f32 %v50, 1e-05
  %v53 = vrsqrt.pop %v51
  %v54 = vmul.f32 %v53, %v51
  %v55 = vmul.f32 %v54, %v53
  %v56 = vmul.f32 0.5, %v55
  %v57 = vsub.f32 1.5, %v56
  %v58 = vmul.f32 %v53, %v57
  %vm59 = vweird.f32 %v51
  %vm60 = vweird.f32 %v53
  %vm61 = vmor %vm59, %vm60
  %v62 = vsel %vm61, %v53, %v58
  %v63 = vrsqrt.pop %v52
  %v64 = vmul.f32 %v63, %v52
  %v65 = vmul.f32 %v64, %v63
  %v66 = vmul.f32 0.5, %v65
  %v67 = vsub.f32 1.5, %v66
  %v68 = vmul.f32 %v63, %v67
  %vm69 = vweird.f32 %v52
  %vm70 = vweird.f32 %v63
  %vm71 = vmor %vm69, %vm70
  %v72 = vsel %vm71, %v63, %v68
  %v73 = vmul.f32 %v39, %v62
  %v74 = vmul.f32 %v40, %v72
  %v75 = vld [vmem:[%s2] sm:$0x1]
  %v77 = vperm.slane %v75, 0
  %v79 = vmul.f32 %v73, %v77
  %v80 = vmul.f32 %v74, %v77
  %v81 = vld [vmem:[%s3] sm:$0x1]
  %v83 = vperm.slane %v81, 0
  %v85 = vadd.f32 %v79, %v83
  %v86 = vadd.f32 %v80, %v83
  %87 = vst.msk [vmem:[%s4] sm:$0xff] %vm23, %v85
  %88 = vst.msk [vmem:[%s4 + $0x8] sm:$0xff] %vm23, %v86
  // Predicated region
  $region18: #{gpt_forward.15} parent=0 // pred_check
    _
  $region19: #{gpt_forward.15} parent=0 // pred_check_branch
    %90 = sbr.rel (0) target = $region21
  $region20: #{gpt_forward.15} parent=0 // pred_region
    _
  $region21: #{gpt_forward.15} parent=0 // pred_fallthru
    _
  // Predicated region
  $region22: #{gpt_forward.15} parent=0 // pred_check
    _
  $region23: #{gpt_forward.15} parent=0 // pred_check_branch
    %92 = sbr.rel (0) target = $region25
  $region24: #{gpt_forward.15} parent=0 // pred_region
    _
  $region25: #{gpt_forward.15} parent=0 // pred_fallthru
    _

// kernel: gpt_forward.13
$region0: #{gpt_forward.13}
  #allocation0 [shape = 'u32[]', space=smem, size = 0x4, offset = 0x4, fixed_abs, tag = 'smem constant byte address 0x4 - core index']
  #allocation1 [shape = 'u32[72,128]{1,0:T(1,128)}', space=vmem, size = 0x9000, scoped, tag = 'internal scratch']
  #allocation2 [shape = 'f32[16,96]{1,0:T(8,128)}', space=vmem, size = 0x2000, scoped, tag = 'scratch operand']
  %s0 = inlined_call_operand.vmem [shape: f32[16,32], index: 0, kind: input, shape index: {}]
  %s1 = inlined_call_operand.vmem [shape: f32[32,96], index: 1, kind: input, shape index: {}]
  %s2 = inlined_call_operand.vmem [shape: f32[1,96], index: 2, kind: input, shape index: {}]
  %s3 = inlined_call_operand.vmem [shape: f32[16,96], index: 3, kind: output, shape index: {}]
  %s4 = sld [smem:[#allocation0]]
  $region30: #{gpt_forward.13} parent=0
    _
  %s6 = ssub.s32 1, %s4
  %s7 = scalar_select 0, %s6, %s4
  // Predicated region
  $region2: #{gpt_forward.13} parent=0 // pred_check
    _
  $region3: #{gpt_forward.13} parent=0 // pred_check_branch
    %9 = sbr.rel (0) target = $region5
  $region4: #{gpt_forward.13} parent=0 // pred_region
    _
  $region5: #{gpt_forward.13} parent=0 // pred_fallthru
    _
  // Predicated region
  $region6: #{gpt_forward.13} parent=0 // pred_check
    _
  $region7: #{gpt_forward.13} parent=0 // pred_check_branch
    %11 = sbr.rel (0) target = $region9
  $region8: #{gpt_forward.13} parent=0 // pred_region
    _
  $region9: #{gpt_forward.13} parent=0 // pred_fallthru
    _
  // Predicated region
  $region10: #{gpt_forward.13} parent=0 // pred_check
    _
  $region11: #{gpt_forward.13} parent=0 // pred_check_branch
    %13 = sbr.rel (0) target = $region13
  $region12: #{gpt_forward.13} parent=0 // pred_region
    _
  $region13: #{gpt_forward.13} parent=0 // pred_fallthru
    _
  %p14 = scmp.eq.s32.totalorder 0, 0
  // Predicated region
  $region14: #{gpt_forward.13} parent=0 // pred_check
    %p15 = pneg %p14
  $region15: #{gpt_forward.13} parent=0 // pred_check_branch
    %17 = sbr.rel (%p15) target = $region17
  $region16: #{gpt_forward.13} parent=0 // pred_region
    %vm18 = vcmask 785408
    %19 = vst.msk [vmem:[#allocation2] sm:$0xff] %vm18, 0.0
    %20 = vst.msk [vmem:[#allocation2 + $0x8] sm:$0xff] %vm18, 0.0
  $region17: #{gpt_forward.13} parent=0 // pred_fallthru
    _
  %v21 = vld [vmem:[#allocation2] sm:$0xff]
  %v22 = vld [vmem:[#allocation2 + $0x8] sm:$0xff]
  %v23 = vld [vmem:[%s0] sm:$0xff]
  %v24 = vld [vmem:[%s0 + $0x8] sm:$0xff]
  %v25 = vld [vmem:[%s1] sm:$0xff]
  %v26 = vld [vmem:[%s1 + $0x8] sm:$0xff]
  %v27 = vld [vmem:[%s1 + $0x10] sm:$0xff]
  %v28 = vld [vmem:[%s1 + $0x18] sm:$0xff]
  %vm29 = vcmask 261120
  %v31 = vsel %vm29, %v23, 0
  %v34 = vsel %vm29, %v24, 0
  %36 = vmatpush.msra.mxu0 0.0
  %37 = vmatpush.msra.mxu0 0.0
  %38 = vmatpush.msra.mxu0 0.0
  %39 = vmatpush.msra.mxu0 0.0
  %40 = vmatpush.msra.mxu0 0.0
  %41 = vmatpush.msra.mxu0 0.0
  %42 = vmatpush.msra.mxu0 0.0
  %43 = vmatpush.msra.mxu0 0.0
  %44 = vmatpush.msra.mxu0 0.0
  %45 = vmatpush.msra.mxu0 0.0
  %46 = vmatpush.msra.mxu0 0.0
  %47 = vmatpush.msra.mxu0 0.0
  %48 = vmatpush.msra.mxu0 %v28
  %49 = vmatpush.msra.mxu0 %v27
  %50 = vmatpush.msra.mxu0 %v26
  %51 = vmatpush.msra.mxu0 %v25
  %52 = vmatmul.f32.gmra.mxu0 %v31
  %v53 = vpop.f32.mrf.mxu0
  %v54 = vadd.f32 0.0, %v53
  %55 = vmatmul.f32.gmra.mxu0 %v34
  %v56 = vpop.f32.mrf.mxu0
  %v57 = vadd.f32 0.0, %v56
  %58 = vdwg.mxu0
  %v59 = vadd.f32 %v21, %v54
  %v60 = vadd.f32 %v22, %v57
  %vm61 = vcmask 785408
  %62 = vst.msk [vmem:[#allocation2] sm:$0xff] %vm61, %v59
  %63 = vst.msk [vmem:[#allocation2 + $0x8] sm:$0xff] %vm61, %v60
  // Predicated region
  $region18: #{gpt_forward.13} parent=0 // pred_check
    %p64 = pneg %p14
  $region19: #{gpt_forward.13} parent=0 // pred_check_branch
    %66 = sbr.rel (%p64) target = $region21
  $region20: #{gpt_forward.13} parent=0 // pred_region
    %v67 = vld [vmem:[#allocation2] sm:$0xff]
    %v68 = vld [vmem:[#allocation2 + $0x8] sm:$0xff]
    %v69 = vld [vmem:[%s2] sm:$0x1]
    %v71 = vperm.slane %v69, 0
    %v73 = vadd.f32 %v67, %v71
    %v74 = vadd.f32 %v68, %v71
    %75 = vst.msk [vmem:[%s3] sm:$0xff] %vm61, %v73
    %76 = vst.msk [vmem:[%s3 + $0x8] sm:$0xff] %vm61, %v74
  $region21: #{gpt_forward.13} parent=0 // pred_fallthru
    _
  // Predicated region
  $region22: #{gpt_forward.13} parent=0 // pred_check
    _
  $region23: #{gpt_forward.13} parent=0 // pred_check_branch
    %78 = sbr.rel (0) target = $region25
  $region24: #{gpt_forward.13} parent=0 // pred_region
    _
  $region25: #{gpt_forward.13} parent=0 // pred_fallthru
    _
  // Predicated region
  $region26: #{gpt_forward.13} parent=0 // pred_check
    _
  $region27: #{gpt_forward.13} parent=0 // pred_check_branch
    %80 = sbr.rel (0) target = $region29
  $region28: #{gpt_forward.13} parent=0 // pred_region
    _
  $region29: #{gpt_forward.13} parent=0 // pred_fallthru
    _

// kernel: gpt_forward.14
$region0: #{gpt_forward.14}
  #allocation0 [shape = 'u32[]', space=smem, size = 0x4, offset = 0x4, fixed_abs, tag = 'smem constant byte address 0x4 - core index']
  #allocation1 [shape = 'u32[72,128]{1,0:T(1,128)}', space=vmem, size = 0x9000, scoped, tag = 'internal scratch']
  #allocation2 [shape = 'f32[8,32]{1,0:T(8,128)}', space=vmem, size = 0x1000, scoped, tag = 'scratch operand']
  %s0 = inlined_call_operand.vmem [shape: f32[2,8,96], index: 0, kind: input, shape index: {}]
  %s1 = inlined_call_operand.vmem [shape: f32[32,32], index: 1, kind: input, shape index: {}]
  %s2 = inlined_call_operand.vmem [shape: f32[1,32], index: 2, kind: input, shape index: {}]
  %s3 = inlined_call_operand.vmem [shape: f32[2,8,32], index: 3, kind: output, shape index: {}]
  %s4 = sld [smem:[#allocation0]]
  $region45: #{gpt_forward.14} parent=0
    _
  %s6 = ssub.s32 1, %s4
  %s7 = scalar_select 0, %s6, %s4
  loop: start=0, step=1, limit=4
  $region2: #{gpt_forward.14} parent=0 // loop_pre_header
    _
  $region3: #{gpt_forward.14} parent=0 // loop_header
    %s9 = sphi 0, %s13
    %p10 = scmp.ge.s32.totalorder %s9, 4
    %s19 = sphi 0, %s21
    %s22 = sphi 0, %s19
    %s23 = sphi 0, %s22
    %s39 = sphi 0, %s23
    %s43 = sphi 0, %s43
    %s45 = sphi 0, %s43
    %s46 = sphi 0, %s45
    %s60 = sphi 0, %s46
    %s64 = sphi 0, %s64
    %s66 = sphi 0, %s64
    %s67 = sphi 0, %s66
    %s81 = sphi 0, %s67
    %s87 = sphi 0, %s89
    %s90 = sphi 0, %s87
    %s91 = sphi 0, %s90
    %s107 = sphi 0, %s91
  $region4: #{gpt_forward.14} parent=0 // loop_header_branch
    %12 = sbr.rel (%p10) target = $region8
  $region5: #{gpt_forward.14} parent=0 // loop_body
    %s14 = ssub.s32 %s9, 1
    %s15 = ssub.s32 %s9, 2
    %s16 = sadd.s32 %s9, 1
    %s17 = ssub.s32 %s9, %s16
    %p18 = scmp.eq.s32.totalorder %s17, 0
    %s20 = sadd.s32 %s19, 1
    %s21 = scalar_select %p18, %s19, %s20
    %p24 = pneg %p18
    %p25 = scmp.eq.s32.totalorder %s9, 1
    %p26 = por %p24, %p25
    %p27 = scmp.ne.s32.totalorder %s19, %s22
    %p28 = scmp.eq.s32.totalorder %s9, 0
    %p29 = por %p27, %p28
    %p30 = scmp.ne.s32.totalorder %s19, %s22
    %p31 = scmp.eq.s32.totalorder %s14, 1
    %p32 = por %p30, %p31
    %p33 = scmp.ne.s32.totalorder %s22, %s23
    %p34 = scmp.eq.s32.totalorder %s14, 0
    %p35 = por %p33, %p34
    %p36 = scmp.ne.s32.totalorder %s22, %s23
    %p37 = scmp.eq.s32.totalorder %s15, 1
    %p38 = por %p36, %p37
    %p40 = scmp.ne.s32.totalorder %s23, %s39
    %p41 = scmp.eq.s32.totalorder %s15, 0
    %p42 = por %p40, %p41
    %s44 = sadd.s32 %s43, 1
    %p47 = scmp.eq.s32.totalorder %s9, 1
    %p48 = scmp.ne.s32.totalorder %s43, %s45
    %p49 = scmp.eq.s32.totalorder %s9, 0
    %p50 = por %p48, %p49
    %p51 = scmp.ne.s32.totalorder %s43, %s45
    %p52 = scmp.eq.s32.totalorder %s14, 1
    %p53 = por %p51, %p52
    %p54 = scmp.ne.s32.totalorder %s45, %s46
    %p55 = scmp.eq.s32.totalorder %s14, 0
    %p56 = por %p54, %p55
    %p57 = scmp.ne.s32.totalorder %s45, %s46
    %p58 = scmp.eq.s32.totalorder %s15, 1
    %p59 = por %p57, %p58
    %p61 = scmp.ne.s32.totalorder %s46, %s60
    %p62 = scmp.eq.s32.totalorder %s15, 0
    %p63 = por %p61, %p62
    %s65 = sadd.s32 %s64, 1
    %p68 = scmp.eq.s32.totalorder %s9, 1
    %p69 = scmp.ne.s32.totalorder %s64, %s66
    %p70 = scmp.eq.s32.totalorder %s9, 0
    %p71 = por %p69, %p70
    %p72 = scmp.ne.s32.totalorder %s64, %s66
    %p73 = scmp.eq.s32.totalorder %s14, 1
    %p74 = por %p72, %p73
    %p75 = scmp.ne.s32.totalorder %s66, %s67
    %p76 = scmp.eq.s32.totalorder %s14, 0
    %p77 = por %p75, %p76
    %p78 = scmp.ne.s32.totalorder %s66, %s67
    %p79 = scmp.eq.s32.totalorder %s15, 1
    %p80 = por %p78, %p79
    %p82 = scmp.ne.s32.totalorder %s67, %s81
    %p83 = scmp.eq.s32.totalorder %s15, 0
    %p84 = por %p82, %p83
    %s85 = ssub.s32 %s9, %s16
    %p86 = scmp.eq.s32.totalorder %s85, 0
    %s88 = sadd.s32 %s87, 1
    %s89 = scalar_select %p86, %s87, %s88
    %p92 = pneg %p86
    %p93 = scmp.eq.s32.totalorder %s9, 1
    %p94 = por %p92, %p93
    %p95 = scmp.ne.s32.totalorder %s87, %s90
    %p96 = scmp.eq.s32.totalorder %s9, 0
    %p97 = por %p95, %p96
    %p98 = scmp.ne.s32.totalorder %s87, %s90
    %p99 = scmp.eq.s32.totalorder %s14, 1
    %p100 = por %p98, %p99
    %p101 = scmp.ne.s32.totalorder %s90, %s91
    %p102 = scmp.eq.s32.totalorder %s14, 0
    %p103 = por %p101, %p102
    %p104 = scmp.ne.s32.totalorder %s90, %s91
    %p105 = scmp.eq.s32.totalorder %s15, 1
    %p106 = por %p104, %p105
    %p108 = scmp.ne.s32.totalorder %s91, %s107
    %p109 = scmp.eq.s32.totalorder %s15, 0
    %p110 = por %p108, %p109
    %p111 = scmp.le.s32.totalorder 1, %s9
    %p112 = scmp.lt.s32.totalorder %s9, 3
    %p113 = pnand %p111, %p112
    %p114 = pneg %p113
    // Predicated region
    $region9: #{gpt_forward.14} parent=5 // pred_check
      _
    $region10: #{gpt_forward.14} parent=5 // pred_check_branch
      %116 = sbr.rel (%p113) target = $region12
    $region11: #{gpt_forward.14} parent=5 // pred_region
      %s117 = ssub.s32 %s9, 1
      // Predicated region
      $region13: #{gpt_forward.14} parent=11 // pred_check
        %p118 = pneg %p56
      $region14: #{gpt_forward.14} parent=11 // pred_check_branch
        %120 = sbr.rel (%p118) target = $region16
      $region15: #{gpt_forward.14} parent=11 // pred_region
        _
      $region16: #{gpt_forward.14} parent=11 // pred_fallthru
        _
      // Predicated region
      $region17: #{gpt_forward.14} parent=11 // pred_check
        %p121 = pneg %p77
      $region18: #{gpt_forward.14} parent=11 // pred_check_branch
        %123 = sbr.rel (%p121) target = $region20
      $region19: #{gpt_forward.14} parent=11 // pred_region
        _
      $region20: #{gpt_forward.14} parent=11 // pred_fallthru
        _
    $region12: #{gpt_forward.14} parent=5 // pred_fallthru
      _
    %p124 = scmp.lt.s32.totalorder %s9, 2
    // Predicated region
    $region21: #{gpt_forward.14} parent=5 // pred_check
      %p125 = pneg %p124
    $region22: #{gpt_forward.14} parent=5 // pred_check_branch
      %127 = sbr.rel (%p125) target = $region24
    $region23: #{gpt_forward.14} parent=5 // pred_region
      // Predicated region
      $region25: #{gpt_forward.14} parent=23 // pred_check
        %p128 = pneg %p29
      $region26: #{gpt_forward.14} parent=23 // pred_check_branch
        %130 = sbr.rel (%p128) target = $region28
      $region27: #{gpt_forward.14} parent=23 // pred_region
        %p131 = scmp.lt.s32.totalorder %s9, 1
        %s132 = scalar_select %p131, %s9, 1
        %s133 = smul.addr %s132, 8
        %s134 = scalar_lea.vmem %s0, %s133
      $region28: #{gpt_forward.14} parent=23 // pred_fallthru
        _
    $region24: #{gpt_forward.14} parent=5 // pred_fallthru
      _
    %p135 = scmp.le.s32.totalorder 1, %s9
    %p136 = scmp.lt.s32.totalorder %s9, 3
    %p137 = pnand %p135, %p136
    %p138 = pneg %p137
    // Predicated region
    $region29: #{gpt_forward.14} parent=5 // pred_check
      _
    $region30: #{gpt_forward.14} parent=5 // pred_check_branch
      %140 = sbr.rel (%p137) target = $region32
    $region31: #{gpt_forward.14} parent=5 // pred_region
      %s141 = ssub.s32 %s9, 1
      %p142 = scmp.lt.s32.totalorder %s14, 1
      %s143 = scalar_select %p142, %s14, 1
      %s144 = smul.addr %s143, 8
      %s145 = scalar_lea.vmem %s0, %s144
      %p146 = pneg %p35
      %p147 = pneg %p32
      %p148 = pneg %p56
      %p149 = pneg %p53
      %p150 = pneg %p77
      %p151 = pneg %p74
      %p152 = pneg %p103
      %p153 = pneg %p100
      %p154 = scmp.lt.s32.totalorder %s14, 1
      %s155 = scalar_select %p154, %s14, 1
      %s156 = smul.addr %s155, 8
      %s157 = scalar_lea.vmem %s3, %s156
      %p158 = scmp.lt.s32.totalorder %s14, 1
      %s159 = scalar_select %p158, %s14, 1
      %s160 = smul.addr %s159, 8
      %s161 = scalar_lea.vmem %s0, %s160
      %p162 = scmp.lt.s32.totalorder %s14, 1
      %s163 = scalar_select %p162, %s14, 1
      %s164 = smul.addr %s163, 8
      %s165 = scalar_lea.vmem %s3, %s164
      %v166 = vlaneseq
      %v167 = vshrl.u32 %v166, 7
      %v168 = vlaneseq
      %v169 = vand.u32 %v168, 127
      %vm170 = vcmp.le.s32.totalorder %v169, %v167
      %v171 = vld [vmem:[%s161] sm:$0xff]
      %v172 = vmul.f32 %v171, 0.35355338
      %174 = vrot.lane.b32.xlu0 %v171, 96
      %v175 = vpop.permute.xlu0 %174
      %vm176 = vcmask 64512
      %v178 = vsel %vm176, %v172, 0
      %v180 = vsel %vm176, %v175, 0
      %182 = vmatpush.xpose.msra.mxu0 0.0
      %183 = vmatpush.xpose.msra.mxu0 0.0
      %184 = vmatpush.xpose.msra.mxu0 0.0
      %185 = vmatpush.xpose.msra.mxu0 0.0
      %186 = vmatpush.xpose.msra.mxu0 0.0
      %187 = vmatpush.xpose.msra.mxu0 0.0
      %188 = vmatpush.xpose.msra.mxu0 0.0
      %189 = vmatpush.xpose.msra.mxu0 0.0
      %190 = vmatpush.xpose.msra.mxu0 0.0
      %191 = vmatpush.xpose.msra.mxu0 0.0
      %192 = vmatpush.xpose.msra.mxu0 0.0
      %193 = vmatpush.xpose.msra.mxu0 0.0
      %194 = vmatpush.xpose.msra.mxu0 0.0
      %195 = vmatpush.xpose.msra.mxu0 0.0
      %196 = vmatpush.xpose.msra.mxu0 0.0
      %197 = vmatpush.xpose.msra.mxu0 %v180
      %198 = vmatmul.f32.gmra.mxu0 %v178
      %v199 = vpop.f32.mrf.mxu0
      %v200 = vadd.f32 0.0, %v199
      %201 = vdwg.mxu0
      %v202 = vsel %vm170, %v200, -1e+09
      %v203 = vsel %vm176, %v202, -inf
      %204 = vmax.xlane.f32.xlu0 %v203
      %v205 = vpop.xlane.xlu0 %204
      %v206 = vsub.f32 %v202, %v205
      %v207 = vmul.f32 %v206, 1.442695
      %v208 = vpow.pop %v207
      %v209 = vsel %vm176, %v208, 0.0
      %210 = vadd.xlane.f32.xlu0 %v209
      %v211 = vpop.xlane.xlu0 %210
      %v212 = vrcp.pop %v211
      %v213 = vmul.f32 %v208, %v212
      %214 = vrot.lane.b32.xlu0 %v171, 64
      %v215 = vpop.permute.xlu0 %214
      %v218 = vsel %vm176, %v213, 0
      %220 = vmatpush.msra.mxu0 0.0
      %221 = vmatpush.msra.mxu0 0.0
      %222 = vmatpush.msra.mxu0 0.0
      %223 = vmatpush.msra.mxu0 0.0
      %224 = vmatpush.msra.mxu0 0.0
      %225 = vmatpush.msra.mxu0 0.0
      %226 = vmatpush.msra.mxu0 0.0
      %227 = vmatpush.msra.mxu0 0.0
      %228 = vmatpush.msra.mxu0 0.0
      %229 = vmatpush.msra.mxu0 0.0
      %230 = vmatpush.msra.mxu0 0.0
      %231 = vmatpush.msra.mxu0 0.0
      %232 = vmatpush.msra.mxu0 0.0
      %233 = vmatpush.msra.mxu0 0.0
      %234 = vmatpush.msra.mxu0 0.0
      %235 = vmatpush.msra.mxu0 %v215
      %236 = vmatmul.f32.gmra.mxu0 %v218
      %v237 = vpop.f32.mrf.mxu0
      %v238 = vadd.f32 0.0, %v237
      %239 = vdwg.mxu0
      %240 = vst.msk [vmem:[#allocation2] sm:$0xff] %vm176, %v238
      %v241 = vld [vmem:[%s161] sm:$0xff]
      %v242 = vmul.f32 %v241, 0.35355338
      %244 = vrot.lane.b32.xlu0 %v242, 120
      %v245 = vpop.permute.xlu0 %244
      %247 = vrot.lane.b32.xlu0 %v241, 88
      %v248 = vpop.permute.xlu0 %247
      %v249 = vsel %vm176, %v245, 0
      %v251 = vsel %vm176, %v248, 0
      %253 = vmatpush.xpose.msra.mxu0 0.0
      %254 = vmatpush.xpose.msra.mxu0 0.0
      %255 = vmatpush.xpose.msra.mxu0 0.0
      %256 = vmatpush.xpose.msra.mxu0 0.0
      %257 = vmatpush.xpose.msra.mxu0 0.0
      %258 = vmatpush.xpose.msra.mxu0 0.0
      %259 = vmatpush.xpose.msra.mxu0 0.0
      %260 = vmatpush.xpose.msra.mxu0 0.0
      %261 = vmatpush.xpose.msra.mxu0 0.0
      %262 = vmatpush.xpose.msra.mxu0 0.0
      %263 = vmatpush.xpose.msra.mxu0 0.0
      %264 = vmatpush.xpose.msra.mxu0 0.0
      %265 = vmatpush.xpose.msra.mxu0 0.0
      %266 = vmatpush.xpose.msra.mxu0 0.0
      %267 = vmatpush.xpose.msra.mxu0 0.0
      %268 = vmatpush.xpose.msra.mxu0 %v251
      %269 = vmatmul.f32.gmra.mxu0 %v249
      %v270 = vpop.f32.mrf.mxu0
      %v271 = vadd.f32 0.0, %v270
      %272 = vdwg.mxu0
      %v273 = vsel %vm170, %v271, -1e+09
      %v274 = vsel %vm176, %v273, -inf
      %275 = vmax.xlane.f32.xlu0 %v274
      %v276 = vpop.xlane.xlu0 %275
      %v277 = vsub.f32 %v273, %v276
      %v278 = vmul.f32 %v277, 1.442695
      %v279 = vpow.pop %v278
      %v280 = vsel %vm176, %v279, 0.0
      %281 = vadd.xlane.f32.xlu0 %v280
      %v282 = vpop.xlane.xlu0 %281
      %v283 = vrcp.pop %v282
      %v284 = vmul.f32 %v279, %v283
      %285 = vrot.lane.b32.xlu0 %v241, 56
      %v286 = vpop.permute.xlu0 %285
      %v289 = vsel %vm176, %v284, 0
      %291 = vmatpush.msra.mxu0 0.0
      %292 = vmatpush.msra.mxu0 0.0
      %293 = vmatpush.msra.mxu0 0.0
      %294 = vmatpush.msra.mxu0 0.0
      %295 = vmatpush.msra.mxu0 0.0
      %296 = vmatpush.msra.mxu0 0.0
      %297 = vmatpush.msra.mxu0 0.0
      %298 = vmatpush.msra.mxu0 0.0
      %299 = vmatpush.msra.mxu0 0.0
      %300 = vmatpush.msra.mxu0 0.0
      %301 = vmatpush.msra.mxu0 0.0
      %302 = vmatpush.msra.mxu0 0.0
      %303 = vmatpush.msra.mxu0 0.0
      %304 = vmatpush.msra.mxu0 0.0
      %305 = vmatpush.msra.mxu0 0.0
      %306 = vmatpush.msra.mxu0 %v286
      %307 = vmatmul.f32.gmra.mxu0 %v289
      %v308 = vpop.f32.mrf.mxu0
      %v309 = vadd.f32 0.0, %v308
      %310 = vdwg.mxu0
      %312 = vrot.lane.b32.xlu0 %v309, 8
      %v313 = vpop.permute.xlu0 %312
      %vm315 = vcmask 130112
      %316 = vst.msk [vmem:[#allocation2] sm:$0xff] %vm315, %v313
      %v317 = vld [vmem:[%s161] sm:$0xff]
      %v318 = vmul.f32 %v317, 0.35355338
      %320 = vrot.lane.b32.xlu0 %v318, 112
      %v321 = vpop.permute.xlu0 %320
      %323 = vrot.lane.b32.xlu0 %v317, 80
      %v324 = vpop.permute.xlu0 %323
      %v325 = vsel %vm176, %v321, 0
      %v327 = vsel %vm176, %v324, 0
      %329 = vmatpush.xpose.msra.mxu0 0.0
      %330 = vmatpush.xpose.msra.mxu0 0.0
      %331 = vmatpush.xpose.msra.mxu0 0.0
      %332 = vmatpush.xpose.msra.mxu0 0.0
      %333 = vmatpush.xpose.msra.mxu0 0.0
      %334 = vmatpush.xpose.msra.mxu0 0.0
      %335 = vmatpush.xpose.msra.mxu0 0.0
      %336 = vmatpush.xpose.msra.mxu0 0.0
      %337 = vmatpush.xpose.msra.mxu0 0.0
      %338 = vmatpush.xpose.msra.mxu0 0.0
      %339 = vmatpush.xpose.msra.mxu0 0.0
      %340 = vmatpush.xpose.msra.mxu0 0.0
      %341 = vmatpush.xpose.msra.mxu0 0.0
      %342 = vmatpush.xpose.msra.mxu0 0.0
      %343 = vmatpush.xpose.msra.mxu0 0.0
      %344 = vmatpush.xpose.msra.mxu0 %v327
      %345 = vmatmul.f32.gmra.mxu0 %v325
      %v346 = vpop.f32.mrf.mxu0
      %v347 = vadd.f32 0.0, %v346
      %348 = vdwg.mxu0
      %v349 = vsel %vm170, %v347, -1e+09
      %v350 = vsel %vm176, %v349, -inf
      %351 = vmax.xlane.f32.xlu0 %v350
      %v352 = vpop.xlane.xlu0 %351
      %v353 = vsub.f32 %v349, %v352
      %v354 = vmul.f32 %v353, 1.442695
      %v355 = vpow.pop %v354
      %v356 = vsel %vm176, %v355, 0.0
      %357 = vadd.xlane.f32.xlu0 %v356
      %v358 = vpop.xlane.xlu0 %357
      %v359 = vrcp.pop %v358
      %v360 = vmul.f32 %v355, %v359
      %361 = vrot.lane.b32.xlu0 %v317, 48
      %v362 = vpop.permute.xlu0 %361
      %v365 = vsel %vm176, %v360, 0
      %367 = vmatpush.msra.mxu0 0.0
      %368 = vmatpush.msra.mxu0 0.0
      %369 = vmatpush.msra.mxu0 0.0
      %370 = vmatpush.msra.mxu0 0.0
      %371 = vmatpush.msra.mxu0 0.0
      %372 = vmatpush.msra.mxu0 0.0
      %373 = vmatpush.msra.mxu0 0.0
      %374 = vmatpush.msra.mxu0 0.0
      %375 = vmatpush.msra.mxu0 0.0
      %376 = vmatpush.msra.mxu0 0.0
      %377 = vmatpush.msra.mxu0 0.0
      %378 = vmatpush.msra.mxu0 0.0
      %379 = vmatpush.msra.mxu0 0.0
      %380 = vmatpush.msra.mxu0 0.0
      %381 = vmatpush.msra.mxu0 0.0
      %382 = vmatpush.msra.mxu0 %v362
      %383 = vmatmul.f32.gmra.mxu0 %v365
      %v384 = vpop.f32.mrf.mxu0
      %v385 = vadd.f32 0.0, %v384
      %386 = vdwg.mxu0
      %388 = vrot.lane.b32.xlu0 %v385, 16
      %v389 = vpop.permute.xlu0 %388
      %vm391 = vcmask 195712
      %392 = vst.msk [vmem:[#allocation2] sm:$0xff] %vm391, %v389
      %v393 = vld [vmem:[%s161] sm:$0xff]
      %v394 = vmul.f32 %v393, 0.35355338
      %396 = vrot.lane.b32.xlu0 %v394, 104
      %v397 = vpop.permute.xlu0 %396
      %399 = vrot.lane.b32.xlu0 %v393, 72
      %v400 = vpop.permute.xlu0 %399
      %v401 = vsel %vm176, %v397, 0
      %v403 = vsel %vm176, %v400, 0
      %405 = vmatpush.xpose.msra.mxu0 0.0
      %406 = vmatpush.xpose.msra.mxu0 0.0
      %407 = vmatpush.xpose.msra.mxu0 0.0
      %408 = vmatpush.xpose.msra.mxu0 0.0
      %409 = vmatpush.xpose.msra.mxu0 0.0
      %410 = vmatpush.xpose.msra.mxu0 0.0
      %411 = vmatpush.xpose.msra.mxu0 0.0
      %412 = vmatpush.xpose.msra.mxu0 0.0
      %413 = vmatpush.xpose.msra.mxu0 0.0
      %414 = vmatpush.xpose.msra.mxu0 0.0
      %415 = vmatpush.xpose.msra.mxu0 0.0
      %416 = vmatpush.xpose.msra.mxu0 0.0
      %417 = vmatpush.xpose.msra.mxu0 0.0
      %418 = vmatpush.xpose.msra.mxu0 0.0
      %419 = vmatpush.xpose.msra.mxu0 0.0
      %420 = vmatpush.xpose.msra.mxu0 %v403
      %421 = vmatmul.f32.gmra.mxu0 %v401
      %v422 = vpop.f32.mrf.mxu0
      %v423 = vadd.f32 0.0, %v422
      %424 = vdwg.mxu0
      %v425 = vsel %vm170, %v423, -1e+09
      %v426 = vsel %vm176, %v425, -inf
      %427 = vmax.xlane.f32.xlu0 %v426
      %v428 = vpop.xlane.xlu0 %427
      %v429 = vsub.f32 %v425, %v428
      %v430 = vmul.f32 %v429, 1.442695
      %v431 = vpow.pop %v430
      %v432 = vsel %vm176, %v431, 0.0
      %433 = vadd.xlane.f32.xlu0 %v432
      %v434 = vpop.xlane.xlu0 %433
      %v435 = vrcp.pop %v434
      %v436 = vmul.f32 %v431, %v435
      %437 = vrot.lane.b32.xlu0 %v393, 40
      %v438 = vpop.permute.xlu0 %437
      %v441 = vsel %vm176, %v436, 0
      %443 = vmatpush.msra.mxu0 0.0
      %444 = vmatpush.msra.mxu0 0.0
      %445 = vmatpush.msra.mxu0 0.0
      %446 = vmatpush.msra.mxu0 0.0
      %447 = vmatpush.msra.mxu0 0.0
      %448 = vmatpush.msra.mxu0 0.0
      %449 = vmatpush.msra.mxu0 0.0
      %450 = vmatpush.msra.mxu0 0.0
      %451 = vmatpush.msra.mxu0 0.0
      %452 = vmatpush.msra.mxu0 0.0
      %453 = vmatpush.msra.mxu0 0.0
      %454 = vmatpush.msra.mxu0 0.0
      %455 = vmatpush.msra.mxu0 0.0
      %456 = vmatpush.msra.mxu0 0.0
      %457 = vmatpush.msra.mxu0 0.0
      %458 = vmatpush.msra.mxu0 %v438
      %459 = vmatmul.f32.gmra.mxu0 %v441
      %v460 = vpop.f32.mrf.mxu0
      %v461 = vadd.f32 0.0, %v460
      %462 = vdwg.mxu0
      %464 = vrot.lane.b32.xlu0 %v461, 24
      %v465 = vpop.permute.xlu0 %464
      %vm467 = vcmask 261312
      %468 = vst.msk [vmem:[#allocation2] sm:$0xff] %vm467, %v465
      %v469 = vld [vmem:[#allocation2] sm:$0xff]
      %v470 = vld [vmem:[%s1] sm:$0xff]
      %v471 = vld [vmem:[%s1 + $0x8] sm:$0xff]
      %v472 = vld [vmem:[%s1 + $0x10] sm:$0xff]
      %v473 = vld [vmem:[%s1 + $0x18] sm:$0xff]
      %v474 = vld [vmem:[%s2] sm:$0x1]
      %v476 = vperm.slane %v474, 0
      %vm478 = vcmask 261120
      %v480 = vsel %vm478, %v469, 0
      %482 = vmatpush.msra.mxu0 0.0
      %483 = vmatpush.msra.mxu0 0.0
      %484 = vmatpush.msra.mxu0 0.0
      %485 = vmatpush.msra.mxu0 0.0
      %486 = vmatpush.msra.mxu0 0.0
      %487 = vmatpush.msra.mxu0 0.0
      %488 = vmatpush.msra.mxu0 0.0
      %489 = vmatpush.msra.mxu0 0.0
      %490 = vmatpush.msra.mxu0 0.0
      %491 = vmatpush.msra.mxu0 0.0
      %492 = vmatpush.msra.mxu0 0.0
      %493 = vmatpush.msra.mxu0 0.0
      %494 = vmatpush.msra.mxu0 %v473
      %495 = vmatpush.msra.mxu0 %v472
      %496 = vmatpush.msra.mxu0 %v471
      %497 = vmatpush.msra.mxu0 %v470
      %498 = vmatmul.f32.gmra.mxu0 %v480
      %v499 = vpop.f32.mrf.mxu0
      %v500 = vadd.f32 %v476, %v499
      %501 = vdwg.mxu0
      %502 = vst.msk [vmem:[%s165] sm:$0xff] %vm478, %v500
      %p503 = scmp.lt.s32.totalorder %s14, 1
      %s504 = scalar_select %p503, %s14, 1
      %s505 = smul.addr %s504, 8
      %s506 = scalar_lea.vmem %s3, %s505
      // Predicated region
      $region33: #{gpt_forward.14} parent=31 // pred_check
        %p507 = pneg %p100
      $region34: #{gpt_forward.14} parent=31 // pred_check_branch
        %509 = sbr.rel (%p507) target = $region36
      $region35: #{gpt_forward.14} parent=31 // pred_region
        _
      $region36: #{gpt_forward.14} parent=31 // pred_fallthru
        _
    $region32: #{gpt_forward.14} parent=5 // pred_fallthru
      _
    %p510 = scmp.le.s32.totalorder 2, %s9
    // Predicated region
    $region37: #{gpt_forward.14} parent=5 // pred_check
      %p511 = pneg %p510
    $region38: #{gpt_forward.14} parent=5 // pred_check_branch
      %513 = sbr.rel (%p511) target = $region40
    $region39: #{gpt_forward.14} parent=5 // pred_region
      %s514 = ssub.s32 %s9, 2
      // Predicated region
      $region41: #{gpt_forward.14} parent=39 // pred_check
        %p515 = pneg %p106
      $region42: #{gpt_forward.14} parent=39 // pred_check_branch
        %517 = sbr.rel (%p515) target = $region44
      $region43: #{gpt_forward.14} parent=39 // pred_region
        %p518 = scmp.lt.s32.totalorder %s15, 1
        %s519 = scalar_select %p518, %s15, 1
        %s520 = smul.addr %s519, 8
        %s521 = scalar_lea.vmem %s3, %s520
      $region44: #{gpt_forward.14} parent=39 // pred_fallthru
        _
    $region40: #{gpt_forward.14} parent=5 // pred_fallthru
      _
  $region6: #{gpt_forward.14} parent=0 // loop_footer
    %s13 = sadd.s32 1, %s9
  $region7: #{gpt_forward.14} parent=0 // loop_footer_branch
    %8 = sbr.rel target = $region3
  $region8: #{gpt_forward.14} parent=0 // loop_exit
    _

// kernel: gpt_forward.16
$region0: #{gpt_forward.16}
  #allocation0 [shape = 'u32[]', space=smem, size = 0x4, offset = 0x4, fixed_abs, tag = 'smem constant byte address 0x4 - core index']
  #allocation1 [shape = 'u32[72,128]{1,0:T(1,128)}', space=vmem, size = 0x9000, scoped, tag = 'internal scratch']
  #allocation2 [shape = 'f32[16,64]{1,0:T(8,128)}', space=vmem, size = 0x2000, scoped, tag = 'scratch operand']
  %s0 = inlined_call_operand.vmem [shape: f32[16,32], index: 0, kind: input, shape index: {}]
  %s1 = inlined_call_operand.vmem [shape: f32[32,64], index: 1, kind: input, shape index: {}]
  %s2 = inlined_call_operand.vmem [shape: f32[1,64], index: 2, kind: input, shape index: {}]
  %s3 = inlined_call_operand.vmem [shape: f32[16,64], index: 3, kind: output, shape index: {}]
  %s4 = sld [smem:[#allocation0]]
  $region30: #{gpt_forward.16} parent=0
    _
  %s6 = ssub.s32 1, %s4
  %s7 = scalar_select 0, %s6, %s4
  // Predicated region
  $region2: #{gpt_forward.16} parent=0 // pred_check
    _
  $region3: #{gpt_forward.16} parent=0 // pred_check_branch
    %9 = sbr.rel (0) target = $region5
  $region4: #{gpt_forward.16} parent=0 // pred_region
    _
  $region5: #{gpt_forward.16} parent=0 // pred_fallthru
    _
  // Predicated region
  $region6: #{gpt_forward.16} parent=0 // pred_check
    _
  $region7: #{gpt_forward.16} parent=0 // pred_check_branch
    %11 = sbr.rel (0) target = $region9
  $region8: #{gpt_forward.16} parent=0 // pred_region
    _
  $region9: #{gpt_forward.16} parent=0 // pred_fallthru
    _
  // Predicated region
  $region10: #{gpt_forward.16} parent=0 // pred_check
    _
  $region11: #{gpt_forward.16} parent=0 // pred_check_branch
    %13 = sbr.rel (0) target = $region13
  $region12: #{gpt_forward.16} parent=0 // pred_region
    _
  $region13: #{gpt_forward.16} parent=0 // pred_fallthru
    _
  %p14 = scmp.eq.s32.totalorder 0, 0
  // Predicated region
  $region14: #{gpt_forward.16} parent=0 // pred_check
    %p15 = pneg %p14
  $region15: #{gpt_forward.16} parent=0 // pred_check_branch
    %17 = sbr.rel (%p15) target = $region17
  $region16: #{gpt_forward.16} parent=0 // pred_region
    %vm18 = vcmask 523264
    %19 = vst.msk [vmem:[#allocation2] sm:$0xff] %vm18, 0.0
    %20 = vst.msk [vmem:[#allocation2 + $0x8] sm:$0xff] %vm18, 0.0
  $region17: #{gpt_forward.16} parent=0 // pred_fallthru
    _
  %v21 = vld [vmem:[#allocation2] sm:$0xff]
  %v22 = vld [vmem:[#allocation2 + $0x8] sm:$0xff]
  %v23 = vld [vmem:[%s0] sm:$0xff]
  %v24 = vld [vmem:[%s0 + $0x8] sm:$0xff]
  %v25 = vld [vmem:[%s1] sm:$0xff]
  %v26 = vld [vmem:[%s1 + $0x8] sm:$0xff]
  %v27 = vld [vmem:[%s1 + $0x10] sm:$0xff]
  %v28 = vld [vmem:[%s1 + $0x18] sm:$0xff]
  %vm29 = vcmask 261120
  %v31 = vsel %vm29, %v23, 0
  %v34 = vsel %vm29, %v24, 0
  %36 = vmatpush.msra.mxu0 0.0
  %37 = vmatpush.msra.mxu0 0.0
  %38 = vmatpush.msra.mxu0 0.0
  %39 = vmatpush.msra.mxu0 0.0
  %40 = vmatpush.msra.mxu0 0.0
  %41 = vmatpush.msra.mxu0 0.0
  %42 = vmatpush.msra.mxu0 0.0
  %43 = vmatpush.msra.mxu0 0.0
  %44 = vmatpush.msra.mxu0 0.0
  %45 = vmatpush.msra.mxu0 0.0
  %46 = vmatpush.msra.mxu0 0.0
  %47 = vmatpush.msra.mxu0 0.0
  %48 = vmatpush.msra.mxu0 %v28
  %49 = vmatpush.msra.mxu0 %v27
  %50 = vmatpush.msra.mxu0 %v26
  %51 = vmatpush.msra.mxu0 %v25
  %52 = vmatmul.f32.gmra.mxu0 %v31
  %v53 = vpop.f32.mrf.mxu0
  %v54 = vadd.f32 0.0, %v53
  %55 = vmatmul.f32.gmra.mxu0 %v34
  %v56 = vpop.f32.mrf.mxu0
  %v57 = vadd.f32 0.0, %v56
  %58 = vdwg.mxu0
  %v59 = vadd.f32 %v21, %v54
  %v60 = vadd.f32 %v22, %v57
  %vm61 = vcmask 523264
  %62 = vst.msk [vmem:[#allocation2] sm:$0xff] %vm61, %v59
  %63 = vst.msk [vmem:[#allocation2 + $0x8] sm:$0xff] %vm61, %v60
  // Predicated region
  $region18: #{gpt_forward.16} parent=0 // pred_check
    %p64 = pneg %p14
  $region19: #{gpt_forward.16} parent=0 // pred_check_branch
    %66 = sbr.rel (%p64) target = $region21
  $region20: #{gpt_forward.16} parent=0 // pred_region
    %v67 = vld [vmem:[#allocation2] sm:$0xff]
    %v68 = vld [vmem:[#allocation2 + $0x8] sm:$0xff]
    %v69 = vld [vmem:[%s2] sm:$0x1]
    %v71 = vperm.slane %v69, 0
    %v73 = vadd.f32 %v67, %v71
    %v74 = vadd.f32 %v68, %v71
    %v75 = vmul.f32 %v73, %v73
    %v76 = vmul.f32 %v74, %v74
    %v77 = vmul.f32 %v73, %v75
    %v78 = vmul.f32 %v74, %v76
    %v79 = vmul.f32 %v77, 0.044715
    %v80 = vmul.f32 %v78, 0.044715
    %v81 = vadd.f32 %v73, %v79
    %v82 = vadd.f32 %v74, %v80
    %v83 = vmul.f32 %v81, 0.7978846
    %v84 = vmul.f32 %v82, 0.7978846
    %v85 = vtanh.pop %v83
    %v86 = vtanh.pop %v84
    %v87 = vadd.f32 %v85, 1.0
    %v88 = vadd.f32 %v86, 1.0
    %v89 = vmul.f32 %v87, 0.5
    %v90 = vmul.f32 %v88, 0.5
    %v91 = vmul.f32 %v73, %v89
    %v92 = vmul.f32 %v74, %v90
    %93 = vst.msk [vmem:[%s3] sm:$0xff] %vm61, %v91
    %94 = vst.msk [vmem:[%s3 + $0x8] sm:$0xff] %vm61, %v92
  $region21: #{gpt_forward.16} parent=0 // pred_fallthru
    _
  // Predicated region
  $region22: #{gpt_forward.16} parent=0 // pred_check
    _
  $region23: #{gpt_forward.16} parent=0 // pred_check_branch
    %96 = sbr.rel (0) target = $region25
  $region24: #{gpt_forward.16} parent=0 // pred_region
    _
  $region25: #{gpt_forward.16} parent=0 // pred_fallthru
    _
  // Predicated region
  $region26: #{gpt_forward.16} parent=0 // pred_check
    _
  $region27: #{gpt_forward.16} parent=0 // pred_check_branch
    %98 = sbr.rel (0) target = $region29
  $region28: #{gpt_forward.16} parent=0 // pred_region
    _
  $region29: #{gpt_forward.16} parent=0 // pred_fallthru
    _

// kernel: gpt_forward.25
$region0: #{gpt_forward.25}
  #allocation0 [shape = 'u32[]', space=smem, size = 0x4, offset = 0x4, fixed_abs, tag = 'smem constant byte address 0x4 - core index']
  #allocation1 [shape = 'u32[72,128]{1,0:T(1,128)}', space=vmem, size = 0x9000, scoped, tag = 'internal scratch']
  #allocation2 [shape = 'f32[16,64]{1,0:T(8,128)}', space=vmem, size = 0x2000, scoped, tag = 'scratch operand']
  %s0 = inlined_call_operand.vmem [shape: f32[16,32], index: 0, kind: input, shape index: {}]
  %s1 = inlined_call_operand.vmem [shape: f32[32,64], index: 1, kind: input, shape index: {}]
  %s2 = inlined_call_operand.vmem [shape: f32[1,64], index: 2, kind: input, shape index: {}]
  %s3 = inlined_call_operand.hbm [shape: f32[16,64], index: 3, kind: output, shape index: {}]
  %s4 = sld [smem:[#allocation0]]
  $region30: #{gpt_forward.25} parent=0
    _
  %s6 = ssub.s32 1, %s4
  %s7 = scalar_select 0, %s6, %s4
  $region1: #{gpt_forward.25} parent=0
    #allocation3 [shape = 'u8[8192]{0}', space=vmem, size = 0x2000, scoped, tag = 'output window, operand 0, single buffered']
    #allocation4 [shape = 's32[1]{0}', space=sflag, size = 0x4, scoped, tag = 'scoped memory for gpt_forward.25']
    %8 = vsyncpa [#allocation4], 0
    // Predicated region
    $region2: #{gpt_forward.25} parent=1 // pred_check
      _
    $region3: #{gpt_forward.25} parent=1 // pred_check_branch
      %10 = sbr.rel (0) target = $region5
    $region4: #{gpt_forward.25} parent=1 // pred_region
      _
    $region5: #{gpt_forward.25} parent=1 // pred_fallthru
      _
    // Predicated region
    $region6: #{gpt_forward.25} parent=1 // pred_check
      _
    $region7: #{gpt_forward.25} parent=1 // pred_check_branch
      %12 = sbr.rel (0) target = $region9
    $region8: #{gpt_forward.25} parent=1 // pred_region
      _
    $region9: #{gpt_forward.25} parent=1 // pred_fallthru
      _
    // Predicated region
    $region10: #{gpt_forward.25} parent=1 // pred_check
      _
    $region11: #{gpt_forward.25} parent=1 // pred_check_branch
      %14 = sbr.rel (0) target = $region13
    $region12: #{gpt_forward.25} parent=1 // pred_region
      _
    $region13: #{gpt_forward.25} parent=1 // pred_fallthru
      _
    %p15 = scmp.eq.s32.totalorder 0, 0
    // Predicated region
    $region14: #{gpt_forward.25} parent=1 // pred_check
      %p16 = pneg %p15
    $region15: #{gpt_forward.25} parent=1 // pred_check_branch
      %18 = sbr.rel (%p16) target = $region17
    $region16: #{gpt_forward.25} parent=1 // pred_region
      %vm19 = vcmask 523264
      %20 = vst.msk [vmem:[#allocation2] sm:$0xff] %vm19, 0.0
      %21 = vst.msk [vmem:[#allocation2 + $0x8] sm:$0xff] %vm19, 0.0
    $region17: #{gpt_forward.25} parent=1 // pred_fallthru
      _
    %v22 = vld [vmem:[#allocation2] sm:$0xff]
    %v23 = vld [vmem:[#allocation2 + $0x8] sm:$0xff]
    %v24 = vld [vmem:[%s0] sm:$0xff]
    %v25 = vld [vmem:[%s0 + $0x8] sm:$0xff]
    %v26 = vld [vmem:[%s1] sm:$0xff]
    %v27 = vld [vmem:[%s1 + $0x8] sm:$0xff]
    %v28 = vld [vmem:[%s1 + $0x10] sm:$0xff]
    %v29 = vld [vmem:[%s1 + $0x18] sm:$0xff]
    %vm30 = vcmask 261120
    %v32 = vsel %vm30, %v24, 0
    %v35 = vsel %vm30, %v25, 0
    %37 = vmatpush.msra.mxu0 0.0
    %38 = vmatpush.msra.mxu0 0.0
    %39 = vmatpush.msra.mxu0 0.0
    %40 = vmatpush.msra.mxu0 0.0
    %41 = vmatpush.msra.mxu0 0.0
    %42 = vmatpush.msra.mxu0 0.0
    %43 = vmatpush.msra.mxu0 0.0
    %44 = vmatpush.msra.mxu0 0.0
    %45 = vmatpush.msra.mxu0 0.0
    %46 = vmatpush.msra.mxu0 0.0
    %47 = vmatpush.msra.mxu0 0.0
    %48 = vmatpush.msra.mxu0 0.0
    %49 = vmatpush.msra.mxu0 %v29
    %50 = vmatpush.msra.mxu0 %v28
    %51 = vmatpush.msra.mxu0 %v27
    %52 = vmatpush.msra.mxu0 %v26
    %53 = vmatmul.f32.gmra.mxu0 %v32
    %v54 = vpop.f32.mrf.mxu0
    %v55 = vadd.f32 0.0, %v54
    %56 = vmatmul.f32.gmra.mxu0 %v35
    %v57 = vpop.f32.mrf.mxu0
    %v58 = vadd.f32 0.0, %v57
    %59 = vdwg.mxu0
    %v60 = vadd.f32 %v22, %v55
    %v61 = vadd.f32 %v23, %v58
    %vm62 = vcmask 523264
    %63 = vst.msk [vmem:[#allocation2] sm:$0xff] %vm62, %v60
    %64 = vst.msk [vmem:[#allocation2 + $0x8] sm:$0xff] %vm62, %v61
    // Predicated region
    $region18: #{gpt_forward.25} parent=1 // pred_check
      %p65 = pneg %p15
    $region19: #{gpt_forward.25} parent=1 // pred_check_branch
      %67 = sbr.rel (%p65) target = $region21
    $region20: #{gpt_forward.25} parent=1 // pred_region
      %v68 = vld [vmem:[#allocation2] sm:$0xff]
      %v69 = vld [vmem:[#allocation2 + $0x8] sm:$0xff]
      %v70 = vld [vmem:[%s2] sm:$0x1]
      %v72 = vperm.slane %v70, 0
      %v74 = vadd.f32 %v68, %v72
      %v75 = vadd.f32 %v69, %v72
      %76 = vst.msk [vmem:[#allocation3] sm:$0xff] %vm62, %v74
      %77 = vst.msk [vmem:[#allocation3 + $0x8] sm:$0xff] %vm62, %v75
    $region21: #{gpt_forward.25} parent=1 // pred_fallthru
      _
    // Predicated region
    $region22: #{gpt_forward.25} parent=1 // pred_check
      _
    $region23: #{gpt_forward.25} parent=1 // pred_check_branch
      %79 = sbr.rel (0) target = $region25
    $region24: #{gpt_forward.25} parent=1 // pred_region
      %81 = vsyncadd [#allocation4], 0
      %s82 = sshll.u32 [#allocation3], 4
      %s83 = int_to_ptr.vmem [resolvable:$true] %s82
      %s84 = sshll.u32 %s3, 4
      %s85 = int_to_ptr.hbm [resolvable:$true] %s84
      %90 = dma.vmem_to_hbm [thread:$0]  %s83, 256, %s85, [#allocation4], 128, 128, 8
    $region25: #{gpt_forward.25} parent=1 // pred_fallthru
      _
    // Predicated region
    $region26: #{gpt_forward.25} parent=1 // pred_check
      _
    $region27: #{gpt_forward.25} parent=1 // pred_check_branch
      %92 = sbr.rel (0) target = $region29
    $region28: #{gpt_forward.25} parent=1 // pred_region
      %94 = dma.done [#allocation4], 256
    $region29: #{gpt_forward.25} parent=1 // pred_fallthru
      _
    %95 = vsyncpa [#allocation4], 1

// kernel: gpt_forward.17
$region0: #{gpt_forward.17}
  #allocation0 [shape = 'u32[]', space=smem, size = 0x4, offset = 0x4, fixed_abs, tag = 'smem constant byte address 0x4 - core index']
  #allocation1 [shape = 'u32[72,128]{1,0:T(1,128)}', space=vmem, size = 0x9000, scoped, tag = 'internal scratch']
  #allocation2 [shape = 'f32[16,32]{1,0:T(8,128)}', space=vmem, size = 0x2000, scoped, tag = 'scratch operand']
  %s0 = inlined_call_operand.vmem [shape: f32[16,64], index: 0, kind: input, shape index: {}]
  %s1 = inlined_call_operand.vmem [shape: f32[64,32], index: 1, kind: input, shape index: {}]
  %s2 = inlined_call_operand.vmem [shape: f32[1,32], index: 2, kind: input, shape index: {}]
  %s3 = inlined_call_operand.vmem [shape: f32[16,32], index: 3, kind: output, shape index: {}]
  %s4 = sld [smem:[#allocation0]]
  $region30: #{gpt_forward.17} parent=0
    _
  %s6 = ssub.s32 1, %s4
  %s7 = scalar_select 0, %s6, %s4
  // Predicated region
  $region2: #{gpt_forward.17} parent=0 // pred_check
    _
  $region3: #{gpt_forward.17} parent=0 // pred_check_branch
    %9 = sbr.rel (0) target = $region5
  $region4: #{gpt_forward.17} parent=0 // pred_region
    _
  $region5: #{gpt_forward.17} parent=0 // pred_fallthru
    _
  // Predicated region
  $region6: #{gpt_forward.17} parent=0 // pred_check
    _
  $region7: #{gpt_forward.17} parent=0 // pred_check_branch
    %11 = sbr.rel (0) target = $region9
  $region8: #{gpt_forward.17} parent=0 // pred_region
    _
  $region9: #{gpt_forward.17} parent=0 // pred_fallthru
    _
  // Predicated region
  $region10: #{gpt_forward.17} parent=0 // pred_check
    _
  $region11: #{gpt_forward.17} parent=0 // pred_check_branch
    %13 = sbr.rel (0) target = $region13
  $region12: #{gpt_forward.17} parent=0 // pred_region
    _
  $region13: #{gpt_forward.17} parent=0 // pred_fallthru
    _
  %p14 = scmp.eq.s32.totalorder 0, 0
  // Predicated region
  $region14: #{gpt_forward.17} parent=0 // pred_check
    %p15 = pneg %p14
  $region15: #{gpt_forward.17} parent=0 // pred_check_branch
    %17 = sbr.rel (%p15) target = $region17
  $region16: #{gpt_forward.17} parent=0 // pred_region
    %vm18 = vcmask 261120
    %19 = vst.msk [vmem:[#allocation2] sm:$0xff] %vm18, 0.0
    %20 = vst.msk [vmem:[#allocation2 + $0x8] sm:$0xff] %vm18, 0.0
  $region17: #{gpt_forward.17} parent=0 // pred_fallthru
    _
  %v21 = vld [vmem:[#allocation2] sm:$0xff]
  %v22 = vld [vmem:[#allocation2 + $0x8] sm:$0xff]
  %v23 = vld [vmem:[%s0] sm:$0xff]
  %v24 = vld [vmem:[%s0 + $0x8] sm:$0xff]
  %v25 = vld [vmem:[%s1] sm:$0xff]
  %v26 = vld [vmem:[%s1 + $0x8] sm:$0xff]
  %v27 = vld [vmem:[%s1 + $0x10] sm:$0xff]
  %v28 = vld [vmem:[%s1 + $0x18] sm:$0xff]
  %v29 = vld [vmem:[%s1 + $0x20] sm:$0xff]
  %v30 = vld [vmem:[%s1 + $0x28] sm:$0xff]
  %v31 = vld [vmem:[%s1 + $0x30] sm:$0xff]
  %v32 = vld [vmem:[%s1 + $0x38] sm:$0xff]
  %vm33 = vcmask 523264
  %v35 = vsel %vm33, %v23, 0
  %v38 = vsel %vm33, %v24, 0
  %40 = vmatpush.msra.mxu0 0.0
  %41 = vmatpush.msra.mxu0 0.0
  %42 = vmatpush.msra.mxu0 0.0
  %43 = vmatpush.msra.mxu0 0.0
  %44 = vmatpush.msra.mxu0 0.0
  %45 = vmatpush.msra.mxu0 0.0
  %46 = vmatpush.msra.mxu0 0.0
  %47 = vmatpush.msra.mxu0 0.0
  %48 = vmatpush.msra.mxu0 %v32
  %49 = vmatpush.msra.mxu0 %v31
  %50 = vmatpush.msra.mxu0 %v30
  %51 = vmatpush.msra.mxu0 %v29
  %52 = vmatpush.msra.mxu0 %v28
  %53 = vmatpush.msra.mxu0 %v27
  %54 = vmatpush.msra.mxu0 %v26
  %55 = vmatpush.msra.mxu0 %v25
  %56 = vmatmul.f32.gmra.mxu0 %v35
  %v57 = vpop.f32.mrf.mxu0
  %v58 = vadd.f32 0.0, %v57
  %59 = vmatmul.f32.gmra.mxu0 %v38
  %v60 = vpop.f32.mrf.mxu0
  %v61 = vadd.f32 0.0, %v60
  %62 = vdwg.mxu0
  %v63 = vadd.f32 %v21, %v58
  %v64 = vadd.f32 %v22, %v61
  %vm65 = vcmask 261120
  %66 = vst.msk [vmem:[#allocation2] sm:$0xff] %vm65, %v63
  %67 = vst.msk [vmem:[#allocation2 + $0x8] sm:$0xff] %vm65, %v64
  // Predicated region
  $region18: #{gpt_forward.17} parent=0 // pred_check
    %p68 = pneg %p14
  $region19: #{gpt_forward.17} parent=0 // pred_check_branch
    %70 = sbr.rel (%p68) target = $region21
  $region20: #{gpt_forward.17} parent=0 // pred_region
    %v71 = vld [vmem:[#allocation2] sm:$0xff]
    %v72 = vld [vmem:[#allocation2 + $0x8] sm:$0xff]
    %v73 = vld [vmem:[%s2] sm:$0x1]
    %v75 = vperm.slane %v73, 0
    %v77 = vadd.f32 %v71, %v75
    %v78 = vadd.f32 %v72, %v75
    %79 = vst.msk [vmem:[%s3] sm:$0xff] %vm65, %v77
    %80 = vst.msk [vmem:[%s3 + $0x8] sm:$0xff] %vm65, %v78
  $region21: #{gpt_forward.17} parent=0 // pred_fallthru
    _
  // Predicated region
  $region22: #{gpt_forward.17} parent=0 // pred_check
    _
  $region23: #{gpt_forward.17} parent=0 // pred_check_branch
    %82 = sbr.rel (0) target = $region25
  $region24: #{gpt_forward.17} parent=0 // pred_region
    _
  $region25: #{gpt_forward.17} parent=0 // pred_fallthru
    _
  // Predicated region
  $region26: #{gpt_forward.17} parent=0 // pred_check
    _
  $region27: #{gpt_forward.17} parent=0 // pred_check_branch
    %84 = sbr.rel (0) target = $region29
  $region28: #{gpt_forward.17} parent=0 // pred_region
    _
  $region29: #{gpt_forward.17} parent=0 // pred_fallthru
    _

</llo_original>
